<compile_context>
chip_gen: v5e
topology: v5e:2x2
jax: 0.10.0
libtpu: 0.0.40
codegen_flags: <defaults>
</compile_context>

<pallas_src>
import jax
import jax.numpy as jnp
from jax.experimental import pallas as pl
from jax.experimental.pallas import tpu as pltpu

EPS = 1e-6


# ------------------------- VMEM budgeting (per chip) ------------------------

def _physical_vmem_bytes():
    try:
        return int(pltpu.get_tpu_info().vmem_capacity_bytes)
    except Exception:
        return 64 * 1024 * 1024   # conservative fallback (v7x per-TC VMEM)


_PHYS_VMEM = _physical_vmem_bytes()
# Scoped VMEM limit handed to the compiler (leave headroom for compiler scratch):
# ~96 MiB on v5e/v6e (128 MiB physical), ~48 MiB on v7x (64 MiB physical).
_VMEM_LIMIT_BYTES = min(max(int(_PHYS_VMEM * 3 // 4), 32 * 1024 * 1024), 96 * 1024 * 1024)
# Budget used when sizing tiles (more conservative than the hard limit).
_TILE_BUDGET_BYTES = int(_VMEM_LIMIT_BYTES * 2 // 3)


def _compiler_params():
    return pltpu.CompilerParams(dimension_semantics=("parallel",),
                                vmem_limit_bytes=_VMEM_LIMIT_BYTES)


def _pick_row_tile(n_rows, d_in, d_out, *, act_itemsize=4, resident_bytes=0, min_steps=8):
    """Largest row tile (multiple of 8, <= 2048) such that the double-buffered
    input/output tiles plus the resident blocks fit the VMEM budget AND the grid
    keeps >= min_steps steps (pipeline overlap + v7x 2-TC sharding)."""
    budget = max(_TILE_BUDGET_BYTES - resident_bytes, 0)
    per_row = 2 * (d_in + d_out) * act_itemsize          # in-tile + out-tile, 2 buffers each
    cap_vmem = max(budget // max(per_row, 1), 8)
    cap_steps = max(pl.cdiv(n_rows, min_steps), 8)       # keep >= min_steps grid steps
    tm = min(int(cap_vmem), int(cap_steps), 2048, max(int(n_rows), 8))
    tm = max((tm // 8) * 8, 8)
    return tm


def _pad_rows(x2d, tm):
    """Pad the row count up to a multiple of tm (zero rows are LayerNorm-safe)."""
    n = x2d.shape[0]
    n_pad = int(pl.cdiv(n, tm)) * tm
    if n_pad != n:
        x2d = jnp.pad(x2d, ((0, n_pad - n), (0, 0)))
    return x2d, n_pad


_ROW = lambda i: (i, 0)   # pipelined row tile
_REP = lambda i: (0, 0)   # VMEM-resident block (same index every grid step)


def _resident_spec(shape, single_buffer):
    """BlockSpec for a grid-invariant (resident) block; single-buffered when allowed."""
    if single_buffer:
        return pl.BlockSpec(shape, _REP, pipeline_mode=pl.Buffered(1))
    return pl.BlockSpec(shape, _REP)


def _call_with_resident_fallback(build, *args):
    """Try single-buffered resident specs first; fall back to default buffering."""
    try:
        return build(True)(*args)
    except Exception:
        # TODO(synk): pl.Buffered(1) rejected by this JAX build; using default 2x buffering.
        return build(False)(*args)


# ----------------------------- kernel helpers ------------------------------

def _ln_diff_inv(x_f32):
    """(x - mean, 1/(std + eps)) with torch.Tensor.std semantics (Bessel-corrected)."""
    d = x_f32.shape[-1]
    mean = jnp.mean(x_f32, axis=-1, keepdims=True)
    diff = x_f32 - mean
    var = jnp.sum(diff * diff, axis=-1, keepdims=True) / (d - 1)   # unbiased, as torch.std
    inv = pl.reciprocal(jnp.sqrt(var) + EPS, approx=True)          # EUP vrcp (own VLIW slot)
    return diff, inv


# ----------------------------- Pallas kernels ------------------------------

def _fused_sublayer_kernel(x_ref, a_ref, b_ref, w_ref, bias_ref, o_ref):
    """out = x + (LayerNorm(x) @ W + bias) for one row tile (dropout = identity)."""
    x = x_ref[...].astype(jnp.float32)                             # (tm, D)
    diff, inv = _ln_diff_inv(x)
    normed = a_ref[...].astype(jnp.float32) * (diff * inv) + b_ref[...].astype(jnp.float32)
    # bf16 MXU operands, f32 accumulation; W is already bf16-resident in VMEM.
    y = jnp.dot(normed.astype(jnp.bfloat16), w_ref[...],
                preferred_element_type=jnp.float32)
    y = y + bias_ref[...].astype(jnp.float32)
    # TODO(synk): training-mode dropout (pltpu.prng_*) not implemented; eval-mode identity.
    o_ref[...] = (x + y).astype(o_ref.dtype)


def _layernorm_kernel(x_ref, a_ref, b_ref, o_ref):
    """a_2 * (x - mean) / (std + eps) + b_2 (torch unbiased std) for one row tile."""
    x = x_ref[...].astype(jnp.float32)
    diff, inv = _ln_diff_inv(x)
    y = a_ref[...].astype(jnp.float32) * (diff * inv) + b_ref[...].astype(jnp.float32)
    o_ref[...] = y.astype(o_ref.dtype)


def _matmul_bias_kernel(x_ref, w_ref, bias_ref, o_ref):
    """y = x @ W + bias for one row tile (bf16 MXU operands, W resident in VMEM)."""
    y = jnp.dot(x_ref[...].astype(jnp.bfloat16), w_ref[...],
                preferred_element_type=jnp.float32)
    o_ref[...] = (y + bias_ref[...].astype(jnp.float32)).astype(o_ref.dtype)


def _residual_add_kernel(x_ref, y_ref, o_ref):
    """out = x + dropout(y); dropout is identity (eval mode)."""
    o_ref[...] = x_ref[...] + y_ref[...]


# ----------------------------- call wrappers -------------------------------

def fused_pre_norm_linear_residual(x2d, a2, b2, w, bias):
    """One pallas_call: out = x + (LN(x) @ W + bias).  Single HBM round trip of x."""
    n, d = x2d.shape
    w_bf16 = w if w.dtype == jnp.bfloat16 else w.astype(jnp.bfloat16)
    resident_bytes = d * d * 2 + 3 * d * 4                 # W(bf16) + gamma/beta/bias(f32)
    tm = _pick_row_tile(n, d, d, resident_bytes=resident_bytes)
    xp, n_pad = _pad_rows(x2d, tm)
    # TODO(synk): for very large D where the resident W no longer fits the budget, add a
    # K-tiled ("arbitrary") contraction axis with an f32 accumulator instead of a resident W.

    def build(single_buffer):
        return pl.pallas_call(
            _fused_sublayer_kernel,
            out_shape=jax.ShapeDtypeStruct((n_pad, d), x2d.dtype),
            grid_spec=pltpu.PrefetchScalarGridSpec(
                num_scalar_prefetch=0,
                grid=(n_pad // tm,),
                in_specs=[pl.BlockSpec((tm, d), _ROW),              # x: pipelined row tiles
                          _resident_spec((1, d), single_buffer),    # a_2 (gamma)
                          _resident_spec((1, d), single_buffer),    # b_2 (beta)
                          _resident_spec((d, d), single_buffer),    # W (bf16), resident
                          _resident_spec((1, d), single_buffer)],   # bias
                out_specs=pl.BlockSpec((tm, d), _ROW),              # lane-dense output tile
            ),
            compiler_params=_compiler_params(),
        )

    out = _call_with_resident_fallback(build, xp, a2, b2, w_bf16, bias)
    return out[:n]


def layernorm_2d(x2d, a2, b2):
    n, d = x2d.shape
    tm = _pick_row_tile(n, d, d, resident_bytes=2 * d * 4)
    xp, n_pad = _pad_rows(x2d, tm)
    out = pl.pallas_call(
        _layernorm_kernel,
        out_shape=jax.ShapeDtypeStruct((n_pad, d), x2d.dtype),
        grid_spec=pltpu.PrefetchScalarGridSpec(
            num_scalar_prefetch=0,
            grid=(n_pad // tm,),
            in_specs=[pl.BlockSpec((tm, d), _ROW),
                      pl.BlockSpec((1, d), _REP),
                      pl.BlockSpec((1, d), _REP)],
            out_specs=pl.BlockSpec((tm, d), _ROW),
        ),
        compiler_params=_compiler_params(),
    )(xp, a2, b2)
    return out[:n]


def matmul_bias_2d(x2d, w, bias):
    n, d = x2d.shape
    dout = w.shape[1]
    w_bf16 = w if w.dtype == jnp.bfloat16 else w.astype(jnp.bfloat16)
    resident_bytes = d * dout * 2 + dout * 4
    tm = _pick_row_tile(n, d, dout, resident_bytes=resident_bytes)
    xp, n_pad = _pad_rows(x2d, tm)

    def build(single_buffer):
        return pl.pallas_call(
            _matmul_bias_kernel,
            out_shape=jax.ShapeDtypeStruct((n_pad, dout), x2d.dtype),
            grid_spec=pltpu.PrefetchScalarGridSpec(
                num_scalar_prefetch=0,
                grid=(n_pad // tm,),
                in_specs=[pl.BlockSpec((tm, d), _ROW),
                          _resident_spec((d, dout), single_buffer),
                          _resident_spec((1, dout), single_buffer)],
                out_specs=pl.BlockSpec((tm, dout), _ROW),
            ),
            compiler_params=_compiler_params(),
        )

    out = _call_with_resident_fallback(build, xp, w_bf16, bias)
    return out[:n]


def residual_add_2d(x2d, y2d):
    n, d = x2d.shape
    tm = _pick_row_tile(n, 2 * d, d)
    xp, n_pad = _pad_rows(x2d, tm)
    yp, _ = _pad_rows(y2d, tm)
    out = pl.pallas_call(
        _residual_add_kernel,
        out_shape=jax.ShapeDtypeStruct((n_pad, d), x2d.dtype),
        grid_spec=pltpu.PrefetchScalarGridSpec(
            num_scalar_prefetch=0,
            grid=(n_pad // tm,),
            in_specs=[pl.BlockSpec((tm, d), _ROW),
                      pl.BlockSpec((tm, d), _ROW)],
            out_specs=pl.BlockSpec((tm, d), _ROW),
        ),
        compiler_params=_compiler_params(),
    )(xp, yp)
    return out[:n]


# ------------------------------ modules ------------------------------------

class LinearSublayer:
    """Example sublayer y = x @ W + b. Recognized by SublayerConnection for the
    fully fused LN->matmul->bias->residual fast path."""

    def __init__(self, w, b):
        self.w = w
        self.w_bf16 = w.astype(jnp.bfloat16)   # resident MXU operand: half the VMEM/DMA
        self.b = b.reshape(1, -1)

    def __call__(self, x):
        shape = x.shape
        x2d = x.reshape(-1, shape[-1])
        y2d = matmul_bias_2d(x2d, self.w_bf16, self.b)
        return y2d.reshape(shape[:-1] + (self.w.shape[1],))


class SublayerConnection:
    """Residual connection with a pre-applied LayerNorm (Pallas TPU kernels)."""

    def __init__(self, size, dropout, dtype=jnp.float32):
        self.size = size
        self.dropout_p = dropout   # TODO(synk): training-mode dropout not implemented (eval).
        # LayerNorm parameters, deterministic init as in the PyTorch module.
        self.a_2 = jnp.ones((1, size), dtype)
        self.b_2 = jnp.zeros((1, size), dtype)

    def __call__(self, x, A, sublayer):
        shape = x.shape
        d = shape[-1]
        x2d = x.reshape(-1, d)

        # Fused fast path: single kernel, single HBM round trip of the activation.
        if (A is None and isinstance(sublayer, LinearSublayer)
                and sublayer.w.shape == (d, d)):
            out2d = fused_pre_norm_linear_residual(
                x2d, self.a_2, self.b_2, sublayer.w_bf16, sublayer.b)
            return out2d.reshape(shape)

        # Generic path: arbitrary Python sublayer between row-tiled LN / residual kernels.
        normed = layernorm_2d(x2d, self.a_2, self.b_2).reshape(shape)
        if A is None:
            y = sublayer(normed)
            return residual_add_2d(x2d, y.reshape(-1, d)).reshape(shape)
        else:
            y, loss = sublayer(normed, A)
            return residual_add_2d(x2d, y.reshape(-1, d)).reshape(shape), loss


# ------------------------------ reference ----------------------------------

def _reference(x, a2, b2, w, b):
    mean = jnp.mean(x, axis=-1, keepdims=True)
    diff = x - mean
    var = jnp.sum(diff * diff, axis=-1, keepdims=True) / (x.shape[-1] - 1)
    std = jnp.sqrt(var)
    normed = a2.reshape(-1) * diff / (std + EPS) + b2.reshape(-1)
    y = normed @ w + b.reshape(-1)
    return x + y


# -------------------------------- main --------------------------------------

if __name__ == "__main__":
    # Lane-dense feature dim (D = 128) and enough rows for a multi-step pipelined
    # row grid (rows = 1024, tm = 128 -> grid = (8,), >=4 steps/core on v7x).
    B, S, D = 2, 512, 128
    key = jax.random.PRNGKey(0)
    kx, kw = jax.random.split(key)

    x = jax.random.normal(kx, (B, S, D), dtype=jnp.float32)
    w = jax.random.normal(kw, (D, D), dtype=jnp.float32) * 0.05
    b = jnp.zeros((1, D), dtype=jnp.float32)

    module = SublayerConnection(size=D, dropout=0.1)
    sublayer = LinearSublayer(w, b)

    ref = _reference(x, module.a_2, module.b_2, w, b)

    # bf16 MXU operands + approx reciprocal => bf16-level tolerance vs. the f32 reference.
    ATOL, RTOL = 2e-2, 2e-2

    # --- A is None branch: fully fused kernel path ---
    out = module(x, None, sublayer)
    out = jax.block_until_ready(out)
    assert out.shape == x.shape and out.dtype == x.dtype
    assert jnp.allclose(out, ref, atol=ATOL, rtol=RTOL), "fused path mismatch vs reference"

    # --- A is not None branch: generic path (LN kernel + sublayer + residual kernel) ---
    def sublayer_with_A(nx, A):
        y = sublayer(nx)
        loss = jnp.sum(A * 0.0)
        return y, loss

    out2, loss = module(x, jnp.ones((D,), jnp.float32), sublayer_with_A)
    out2 = jax.block_until_ready(out2)
    assert jnp.allclose(out2, ref, atol=ATOL, rtol=RTOL), "generic path mismatch vs reference"
    assert loss.shape == ()

    print("KERNEL_OK")
</pallas_src>

<mosaic_0001>
module attributes {stable_mosaic.version = 11 : i64} {
  func.func @_fused_sublayer_kernel(%arg0: i32, %arg1: memref<128x128xf32, #tpu.memory_space<vmem>>, %arg2: memref<1x128xf32, #tpu.memory_space<vmem>>, %arg3: memref<1x128xf32, #tpu.memory_space<vmem>>, %arg4: memref<128x128xbf16, #tpu.memory_space<vmem>>, %arg5: memref<1x128xf32, #tpu.memory_space<vmem>>, %arg6: memref<128x128xf32, #tpu.memory_space<vmem>>) attributes {dimension_semantics = [#tpu.dimension_semantics<parallel>], iteration_bounds = array<i64: 8>, scalar_prefetch = 0 : i64, scratch_operands = 0 : i64, tpu.core_type = #tpu.core_type<tc>, window_params = [{transform_indices = @transform_0, window_bounds = array<i64: 128, 128>}, {pipeline_mode = #tpu.pipeline_mode<synchronous>, transform_indices = @transform_1, window_bounds = array<i64: 1, 128>}, {pipeline_mode = #tpu.pipeline_mode<synchronous>, transform_indices = @transform_2, window_bounds = array<i64: 1, 128>}, {pipeline_mode = #tpu.pipeline_mode<synchronous>, transform_indices = @transform_3, window_bounds = array<i64: 128, 128>}, {pipeline_mode = #tpu.pipeline_mode<synchronous>, transform_indices = @transform_4, window_bounds = array<i64: 1, 128>}, {transform_indices = @transform_5, window_bounds = array<i64: 128, 128>}]} {
    %c0 = arith.constant 0 : index
    %c0_0 = arith.constant 0 : index
    %0 = vector.load %arg1[%c0, %c0_0] : memref<128x128xf32, #tpu.memory_space<vmem>>, vector<128x128xf32>
    %cst = arith.constant dense<0.000000e+00> : vector<128xf32>
    %1 = vector.multi_reduction <add>, %0, %cst [1] : vector<128x128xf32> to vector<128xf32>
    %2 = vector.shape_cast %1 : vector<128xf32> to vector<128x1xf32>
    %cst_1 = arith.constant 1.280000e+02 : f32
    %3 = vector.broadcast %cst_1 : f32 to vector<128x1xf32>
    %4 = arith.divf %2, %3 : vector<128x1xf32>
    %5 = vector.broadcast %4 : vector<128x1xf32> to vector<128x128xf32>
    %6 = arith.subf %0, %5 : vector<128x128xf32>
    %7 = arith.mulf %6, %6 : vector<128x128xf32>
    %cst_2 = arith.constant dense<0.000000e+00> : vector<128xf32>
    %8 = vector.multi_reduction <add>, %7, %cst_2 [1] : vector<128x128xf32> to vector<128xf32>
    %9 = vector.shape_cast %8 : vector<128xf32> to vector<128x1xf32>
    %cst_3 = arith.constant 1.270000e+02 : f32
    %10 = vector.broadcast %cst_3 : f32 to vector<128x1xf32>
    %11 = arith.divf %9, %10 : vector<128x1xf32>
    %12 = math.sqrt %11 : vector<128x1xf32>
    %cst_4 = arith.constant 9.99999997E-7 : f32
    %13 = vector.broadcast %cst_4 : f32 to vector<128x1xf32>
    %14 = arith.addf %12, %13 : vector<128x1xf32>
    %15 = tpu.reciprocal %14 {approx = true} : vector<128x1xf32> -> vector<128x1xf32>
    %c0_5 = arith.constant 0 : index
    %c0_6 = arith.constant 0 : index
    %16 = vector.load %arg2[%c0_5, %c0_6] : memref<1x128xf32, #tpu.memory_space<vmem>>, vector<1x128xf32>
    %17 = vector.broadcast %15 : vector<128x1xf32> to vector<128x128xf32>
    %18 = arith.mulf %6, %17 : vector<128x128xf32>
    %19 = vector.broadcast %16 : vector<1x128xf32> to vector<128x128xf32>
    %20 = arith.mulf %19, %18 : vector<128x128xf32>
    %c0_7 = arith.constant 0 : index
    %c0_8 = arith.constant 0 : index
    %21 = vector.load %arg3[%c0_7, %c0_8] : memref<1x128xf32, #tpu.memory_space<vmem>>, vector<1x128xf32>
    %22 = vector.broadcast %21 : vector<1x128xf32> to vector<128x128xf32>
    %23 = arith.addf %20, %22 : vector<128x128xf32>
    %24 = arith.truncf %23 : vector<128x128xf32> to vector<128x128xbf16>
    %c0_9 = arith.constant 0 : index
    %c0_10 = arith.constant 0 : index
    %25 = vector.load %arg4[%c0_9, %c0_10] : memref<128x128xbf16, #tpu.memory_space<vmem>>, vector<128x128xbf16>
    %cst_11 = arith.constant dense<0.000000e+00> : vector<128x128xf32>
    %26 = tpu.matmul %24, %25, %cst_11 {dimension_numbers = #tpu.dot_dimension_numbers<[1], [0], [0], [1], [0, 0, 1, 1], [], []>} : vector<128x128xbf16>, vector<128x128xbf16>, vector<128x128xf32> -> vector<128x128xf32>
    %c0_12 = arith.constant 0 : index
    %c0_13 = arith.constant 0 : index
    %27 = vector.load %arg5[%c0_12, %c0_13] : memref<1x128xf32, #tpu.memory_space<vmem>>, vector<1x128xf32>
    %28 = vector.broadcast %27 : vector<1x128xf32> to vector<128x128xf32>
    %29 = arith.addf %26, %28 : vector<128x128xf32>
    %30 = arith.addf %0, %29 : vector<128x128xf32>
    %c0_14 = arith.constant 0 : index
    %c0_15 = arith.constant 0 : index
    %31 = vector.load %arg6[%c0_14, %c0_15] : memref<128x128xf32, #tpu.memory_space<vmem>>, vector<128x128xf32>
    tpu.vector_store %arg6[%c0_14, %c0_15], %30 {strides = array<i32>} : memref<128x128xf32, #tpu.memory_space<vmem>>, vector<128x128xf32>,
    return
  }
  func.func @transform_0(%arg0: i32) -> (i32, i32) {
    %c0_i32 = arith.constant 0 : i32
    %c0_i32_0 = arith.constant 0 : i32
    return %arg0, %c0_i32 : i32, i32
  }
  func.func @transform_1(%arg0: i32) -> (i32, i32) {
    %c0_i32 = arith.constant 0 : i32
    %c0_i32_0 = arith.constant 0 : i32
    %c0_i32_1 = arith.constant 0 : i32
    return %c0_i32, %c0_i32_0 : i32, i32
  }
  func.func @transform_2(%arg0: i32) -> (i32, i32) {
    %c0_i32 = arith.constant 0 : i32
    %c0_i32_0 = arith.constant 0 : i32
    %c0_i32_1 = arith.constant 0 : i32
    return %c0_i32, %c0_i32_0 : i32, i32
  }
  func.func @transform_3(%arg0: i32) -> (i32, i32) {
    %c0_i32 = arith.constant 0 : i32
    %c0_i32_0 = arith.constant 0 : i32
    %c0_i32_1 = arith.constant 0 : i32
    return %c0_i32, %c0_i32_0 : i32, i32
  }
  func.func @transform_4(%arg0: i32) -> (i32, i32) {
    %c0_i32 = arith.constant 0 : i32
    %c0_i32_0 = arith.constant 0 : i32
    %c0_i32_1 = arith.constant 0 : i32
    return %c0_i32, %c0_i32_0 : i32, i32
  }
  func.func @transform_5(%arg0: i32) -> (i32, i32) {
    %c0_i32 = arith.constant 0 : i32
    %c0_i32_0 = arith.constant 0 : i32
    return %arg0, %c0_i32 : i32, i32
  }
}

module attributes {stable_mosaic.version = 11 : i64} {
  func.func @_fused_sublayer_kernel(%arg0: i32, %arg1: memref<128x128xf32, #tpu.memory_space<vmem>>, %arg2: memref<1x128xf32, #tpu.memory_space<vmem>>, %arg3: memref<1x128xf32, #tpu.memory_space<vmem>>, %arg4: memref<128x128xbf16, #tpu.memory_space<vmem>>, %arg5: memref<1x128xf32, #tpu.memory_space<vmem>>, %arg6: memref<128x128xf32, #tpu.memory_space<vmem>>) attributes {dimension_semantics = [#tpu.dimension_semantics<parallel>], iteration_bounds = array<i64: 8>, scalar_prefetch = 0 : i64, scratch_operands = 0 : i64, tpu.core_type = #tpu.core_type<tc>, window_params = [{transform_indices = @transform_0, window_bounds = array<i64: 128, 128>}, {pipeline_mode = #tpu.pipeline_mode<synchronous>, transform_indices = @transform_1, window_bounds = array<i64: 1, 128>}, {pipeline_mode = #tpu.pipeline_mode<synchronous>, transform_indices = @transform_2, window_bounds = array<i64: 1, 128>}, {pipeline_mode = #tpu.pipeline_mode<synchronous>, transform_indices = @transform_3, window_bounds = array<i64: 128, 128>}, {pipeline_mode = #tpu.pipeline_mode<synchronous>, transform_indices = @transform_4, window_bounds = array<i64: 1, 128>}, {transform_indices = @transform_5, window_bounds = array<i64: 128, 128>}]} {
    %c0 = arith.constant 0 : index
    %c0_0 = arith.constant 0 : index
    %0 = vector.load %arg1[%c0, %c0_0] : memref<128x128xf32, #tpu.memory_space<vmem>>, vector<128x128xf32>
    %cst = arith.constant dense<0.000000e+00> : vector<128xf32>
    %1 = vector.multi_reduction <add>, %0, %cst [1] : vector<128x128xf32> to vector<128xf32>
    %2 = vector.shape_cast %1 : vector<128xf32> to vector<128x1xf32>
    %cst_1 = arith.constant 1.280000e+02 : f32
    %3 = vector.broadcast %cst_1 : f32 to vector<128x1xf32>
    %4 = arith.divf %2, %3 : vector<128x1xf32>
    %5 = vector.broadcast %4 : vector<128x1xf32> to vector<128x128xf32>
    %6 = arith.subf %0, %5 : vector<128x128xf32>
    %7 = arith.mulf %6, %6 : vector<128x128xf32>
    %cst_2 = arith.constant dense<0.000000e+00> : vector<128xf32>
    %8 = vector.multi_reduction <add>, %7, %cst_2 [1] : vector<128x128xf32> to vector<128xf32>
    %9 = vector.shape_cast %8 : vector<128xf32> to vector<128x1xf32>
    %cst_3 = arith.constant 1.270000e+02 : f32
    %10 = vector.broadcast %cst_3 : f32 to vector<128x1xf32>
    %11 = arith.divf %9, %10 : vector<128x1xf32>
    %12 = math.sqrt %11 : vector<128x1xf32>
    %cst_4 = arith.constant 9.99999997E-7 : f32
    %13 = vector.broadcast %cst_4 : f32 to vector<128x1xf32>
    %14 = arith.addf %12, %13 : vector<128x1xf32>
    %15 = tpu.reciprocal %14 {approx = true} : vector<128x1xf32> -> vector<128x1xf32>
    %c0_5 = arith.constant 0 : index
    %c0_6 = arith.constant 0 : index
    %16 = vector.load %arg2[%c0_5, %c0_6] : memref<1x128xf32, #tpu.memory_space<vmem>>, vector<1x128xf32>
    %17 = vector.broadcast %15 : vector<128x1xf32> to vector<128x128xf32>
    %18 = arith.mulf %6, %17 : vector<128x128xf32>
    %19 = vector.broadcast %16 : vector<1x128xf32> to vector<128x128xf32>
    %20 = arith.mulf %19, %18 : vector<128x128xf32>
    %c0_7 = arith.constant 0 : index
    %c0_8 = arith.constant 0 : index
    %21 = vector.load %arg3[%c0_7, %c0_8] : memref<1x128xf32, #tpu.memory_space<vmem>>, vector<1x128xf32>
    %22 = vector.broadcast %21 : vector<1x128xf32> to vector<128x128xf32>
    %23 = arith.addf %20, %22 : vector<128x128xf32>
    %24 = arith.truncf %23 : vector<128x128xf32> to vector<128x128xbf16>
    %c0_9 = arith.constant 0 : index
    %c0_10 = arith.constant 0 : index
    %25 = vector.load %arg4[%c0_9, %c0_10] : memref<128x128xbf16, #tpu.memory_space<vmem>>, vector<128x128xbf16>
    %cst_11 = arith.constant dense<0.000000e+00> : vector<128x128xf32>
    %26 = tpu.matmul %24, %25, %cst_11 {dimension_numbers = #tpu.dot_dimension_numbers<[1], [0], [0], [1], [0, 0, 1, 1], [], []>} : vector<128x128xbf16>, vector<128x128xbf16>, vector<128x128xf32> -> vector<128x128xf32>
    %c0_12 = arith.constant 0 : index
    %c0_13 = arith.constant 0 : index
    %27 = vector.load %arg5[%c0_12, %c0_13] : memref<1x128xf32, #tpu.memory_space<vmem>>, vector<1x128xf32>
    %28 = vector.broadcast %27 : vector<1x128xf32> to vector<128x128xf32>
    %29 = arith.addf %26, %28 : vector<128x128xf32>
    %30 = arith.addf %0, %29 : vector<128x128xf32>
    %c0_14 = arith.constant 0 : index
    %c0_15 = arith.constant 0 : index
    %31 = vector.load %arg6[%c0_14, %c0_15] : memref<128x128xf32, #tpu.memory_space<vmem>>, vector<128x128xf32>
    tpu.vector_store %arg6[%c0_14, %c0_15], %30 {strides = array<i32>} : memref<128x128xf32, #tpu.memory_space<vmem>>, vector<128x128xf32>,
    return
  }
  func.func @transform_0(%arg0: i32) -> (i32, i32) {
    %c0_i32 = arith.constant 0 : i32
    %c0_i32_0 = arith.constant 0 : i32
    return %arg0, %c0_i32 : i32, i32
  }
  func.func @transform_1(%arg0: i32) -> (i32, i32) {
    %c0_i32 = arith.constant 0 : i32
    %c0_i32_0 = arith.constant 0 : i32
    %c0_i32_1 = arith.constant 0 : i32
    return %c0_i32, %c0_i32_0 : i32, i32
  }
  func.func @transform_2(%arg0: i32) -> (i32, i32) {
    %c0_i32 = arith.constant 0 : i32
    %c0_i32_0 = arith.constant 0 : i32
    %c0_i32_1 = arith.constant 0 : i32
    return %c0_i32, %c0_i32_0 : i32, i32
  }
  func.func @transform_3(%arg0: i32) -> (i32, i32) {
    %c0_i32 = arith.constant 0 : i32
    %c0_i32_0 = arith.constant 0 : i32
    %c0_i32_1 = arith.constant 0 : i32
    return %c0_i32, %c0_i32_0 : i32, i32
  }
  func.func @transform_4(%arg0: i32) -> (i32, i32) {
    %c0_i32 = arith.constant 0 : i32
    %c0_i32_0 = arith.constant 0 : i32
    %c0_i32_1 = arith.constant 0 : i32
    return %c0_i32, %c0_i32_0 : i32, i32
  }
  func.func @transform_5(%arg0: i32) -> (i32, i32) {
    %c0_i32 = arith.constant 0 : i32
    %c0_i32_0 = arith.constant 0 : i32
    return %arg0, %c0_i32 : i32, i32
  }
}

</mosaic_0001>

<llo_original>
// kernel: tpu_custom_call.1
$region0: #{tpu_custom_call.1}
  #allocation0 [shape = 'u32[]', space=smem, size = 0x4, offset = 0x4, fixed_abs, tag = 'smem constant byte address 0x4 - core index']
  #allocation1 [shape = 'u32[72,128]{1,0:T(1,128)}', space=vmem, size = 0x9000, scoped, tag = 'internal scratch']
  %s0 = inlined_call_operand.hbm [shape: f32[1024,128], index: 0, kind: input, shape index: {}]
  %s1 = inlined_call_operand.hbm [shape: f32[1,128], index: 1, kind: input, shape index: {}]
  %s2 = inlined_call_operand.vmem [shape: f32[1,128], index: 2, kind: input, shape index: {}]
  %s3 = inlined_call_operand.hbm [shape: bf16[128,128], index: 3, kind: input, shape index: {}]
  %s4 = inlined_call_operand.vmem [shape: f32[1,128], index: 4, kind: input, shape index: {}]
  %s5 = inlined_call_operand.hbm [shape: f32[1024,128], index: 5, kind: output, shape index: {}]
  %s6 = sld [smem:[#allocation0]]
  $region65: #{tpu_custom_call.1} parent=0
    _
  %s8 = ssub.s32 1, %s6
  %s9 = scalar_select 0, %s8, %s6
  $region1: #{tpu_custom_call.1} parent=0
    #allocation2 [shape = 'u8[131072]{0}', space=vmem, size = 0x20000, scoped, tag = 'input window, operand 0']
    #allocation3 [shape = 's32[2]{0}', space=sflag, size = 0x8, scoped, tag = 'scoped memory for tpu_custom_call.1']
    #allocation4 [shape = 's32[2]{0}', space=sflag, size = 0x8, scoped, tag = 'scoped memory for tpu_custom_call.1']
    #allocation5 [shape = 'u8[512]{0}', space=vmem, size = 0x400, scoped, tag = 'input window, operand 1, single buffered']
    #allocation6 [shape = 's32[1]{0}', space=sflag, size = 0x4, scoped, tag = 'scoped memory for tpu_custom_call.1']
    #allocation7 [shape = 'u8[32768]{0}', space=vmem, size = 0x8000, scoped, tag = 'input window, operand 3, single buffered']
    #allocation8 [shape = 'u8[131072]{0}', space=vmem, size = 0x20000, scoped, tag = 'output window, operand 0']
    %10 = vsyncpa [#allocation3], 0
    %s11 = scalar_lea.sflag [#allocation3], 1
    %12 = vsyncpa %s11, 0
    %13 = vsyncpa [#allocation6], 0
    %14 = vsyncpa [#allocation4], 0
    %s15 = scalar_lea.sflag [#allocation4], 1
    %16 = vsyncpa %s15, 0
    loop: start=0, step=1, limit=10
    $region2: #{tpu_custom_call.1} parent=1 // loop_pre_header
      _
    $region3: #{tpu_custom_call.1} parent=1 // loop_header
      %s18 = sphi 0, %s22
      %p19 = scmp.ge.s32.totalorder %s18, 10
      %s28 = sphi 0, %s30
      %s31 = sphi 0, %s28
      %s32 = sphi 0, %s31
      %s48 = sphi 0, %s32
      %s52 = sphi 0, %s52
      %s54 = sphi 0, %s52
      %s55 = sphi 0, %s54
      %s69 = sphi 0, %s55
      %s73 = sphi 0, %s73
      %s75 = sphi 0, %s73
      %s76 = sphi 0, %s75
      %s90 = sphi 0, %s76
      %s94 = sphi 0, %s94
      %s96 = sphi 0, %s94
      %s97 = sphi 0, %s96
      %s111 = sphi 0, %s97
      %s115 = sphi 0, %s115
      %s117 = sphi 0, %s115
      %s118 = sphi 0, %s117
      %s132 = sphi 0, %s118
      %s138 = sphi 0, %s140
      %s141 = sphi 0, %s138
      %s142 = sphi 0, %s141
      %s158 = sphi 0, %s142
    $region4: #{tpu_custom_call.1} parent=1 // loop_header_branch
      %21 = sbr.rel (%p19) target = $region8
    $region5: #{tpu_custom_call.1} parent=1 // loop_body
      %s23 = ssub.s32 %s18, 1
      %s24 = ssub.s32 %s18, 2
      %s25 = sadd.s32 %s18, 1
      %s26 = ssub.s32 %s18, %s25
      %p27 = scmp.eq.s32.totalorder %s26, 0
      %s29 = sadd.s32 %s28, 1
      %s30 = scalar_select %p27, %s28, %s29
      %p33 = pneg %p27
      %p34 = scmp.eq.s32.totalorder %s18, 7
      %p35 = por %p33, %p34
      %p36 = scmp.ne.s32.totalorder %s28, %s31
      %p37 = scmp.eq.s32.totalorder %s18, 0
      %p38 = por %p36, %p37
      %p39 = scmp.ne.s32.totalorder %s28, %s31
      %p40 = scmp.eq.s32.totalorder %s23, 7
      %p41 = por %p39, %p40
      %p42 = scmp.ne.s32.totalorder %s31, %s32
      %p43 = scmp.eq.s32.totalorder %s23, 0
      %p44 = por %p42, %p43
      %p45 = scmp.ne.s32.totalorder %s31, %s32
      %p46 = scmp.eq.s32.totalorder %s24, 7
      %p47 = por %p45, %p46
      %p49 = scmp.ne.s32.totalorder %s32, %s48
      %p50 = scmp.eq.s32.totalorder %s24, 0
      %p51 = por %p49, %p50
      %s53 = sadd.s32 %s52, 1
      %p56 = scmp.eq.s32.totalorder %s18, 7
      %p57 = scmp.ne.s32.totalorder %s52, %s54
      %p58 = scmp.eq.s32.totalorder %s18, 0
      %p59 = por %p57, %p58
      %p60 = scmp.ne.s32.totalorder %s52, %s54
      %p61 = scmp.eq.s32.totalorder %s23, 7
      %p62 = por %p60, %p61
      %p63 = scmp.ne.s32.totalorder %s54, %s55
      %p64 = scmp.eq.s32.totalorder %s23, 0
      %p65 = por %p63, %p64
      %p66 = scmp.ne.s32.totalorder %s54, %s55
      %p67 = scmp.eq.s32.totalorder %s24, 7
      %p68 = por %p66, %p67
      %p70 = scmp.ne.s32.totalorder %s55, %s69
      %p71 = scmp.eq.s32.totalorder %s24, 0
      %p72 = por %p70, %p71
      %s74 = sadd.s32 %s73, 1
      %p77 = scmp.eq.s32.totalorder %s18, 7
      %p78 = scmp.ne.s32.totalorder %s73, %s75
      %p79 = scmp.eq.s32.totalorder %s18, 0
      %p80 = por %p78, %p79
      %p81 = scmp.ne.s32.totalorder %s73, %s75
      %p82 = scmp.eq.s32.totalorder %s23, 7
      %p83 = por %p81, %p82
      %p84 = scmp.ne.s32.totalorder %s75, %s76
      %p85 = scmp.eq.s32.totalorder %s23, 0
      %p86 = por %p84, %p85
      %p87 = scmp.ne.s32.totalorder %s75, %s76
      %p88 = scmp.eq.s32.totalorder %s24, 7
      %p89 = por %p87, %p88
      %p91 = scmp.ne.s32.totalorder %s76, %s90
      %p92 = scmp.eq.s32.totalorder %s24, 0
      %p93 = por %p91, %p92
      %s95 = sadd.s32 %s94, 1
      %p98 = scmp.eq.s32.totalorder %s18, 7
      %p99 = scmp.ne.s32.totalorder %s94, %s96
      %p100 = scmp.eq.s32.totalorder %s18, 0
      %p101 = por %p99, %p100
      %p102 = scmp.ne.s32.totalorder %s94, %s96
      %p103 = scmp.eq.s32.totalorder %s23, 7
      %p104 = por %p102, %p103
      %p105 = scmp.ne.s32.totalorder %s96, %s97
      %p106 = scmp.eq.s32.totalorder %s23, 0
      %p107 = por %p105, %p106
      %p108 = scmp.ne.s32.totalorder %s96, %s97
      %p109 = scmp.eq.s32.totalorder %s24, 7
      %p110 = por %p108, %p109
      %p112 = scmp.ne.s32.totalorder %s97, %s111
      %p113 = scmp.eq.s32.totalorder %s24, 0
      %p114 = por %p112, %p113
      %s116 = sadd.s32 %s115, 1
      %p119 = scmp.eq.s32.totalorder %s18, 7
      %p120 = scmp.ne.s32.totalorder %s115, %s117
      %p121 = scmp.eq.s32.totalorder %s18, 0
      %p122 = por %p120, %p121
      %p123 = scmp.ne.s32.totalorder %s115, %s117
      %p124 = scmp.eq.s32.totalorder %s23, 7
      %p125 = por %p123, %p124
      %p126 = scmp.ne.s32.totalorder %s117, %s118
      %p127 = scmp.eq.s32.totalorder %s23, 0
      %p128 = por %p126, %p127
      %p129 = scmp.ne.s32.totalorder %s117, %s118
      %p130 = scmp.eq.s32.totalorder %s24, 7
      %p131 = por %p129, %p130
      %p133 = scmp.ne.s32.totalorder %s118, %s132
      %p134 = scmp.eq.s32.totalorder %s24, 0
      %p135 = por %p133, %p134
      %s136 = ssub.s32 %s18, %s25
      %p137 = scmp.eq.s32.totalorder %s136, 0
      %s139 = sadd.s32 %s138, 1
      %s140 = scalar_select %p137, %s138, %s139
      %p143 = pneg %p137
      %p144 = scmp.eq.s32.totalorder %s18, 7
      %p145 = por %p143, %p144
      %p146 = scmp.ne.s32.totalorder %s138, %s141
      %p147 = scmp.eq.s32.totalorder %s18, 0
      %p148 = por %p146, %p147
      %p149 = scmp.ne.s32.totalorder %s138, %s141
      %p150 = scmp.eq.s32.totalorder %s23, 7
      %p151 = por %p149, %p150
      %p152 = scmp.ne.s32.totalorder %s141, %s142
      %p153 = scmp.eq.s32.totalorder %s23, 0
      %p154 = por %p152, %p153
      %p155 = scmp.ne.s32.totalorder %s141, %s142
      %p156 = scmp.eq.s32.totalorder %s24, 7
      %p157 = por %p155, %p156
      %p159 = scmp.ne.s32.totalorder %s142, %s158
      %p160 = scmp.eq.s32.totalorder %s24, 0
      %p161 = por %p159, %p160
      %p162 = scmp.le.s32.totalorder 1, %s18
      %p163 = scmp.lt.s32.totalorder %s18, 9
      %p164 = pnand %p162, %p163
      %p165 = pneg %p164
      // Predicated region
      $region9: #{tpu_custom_call.1} parent=5 // pred_check
        _
      $region10: #{tpu_custom_call.1} parent=5 // pred_check_branch
        %167 = sbr.rel (%p164) target = $region12
      $region11: #{tpu_custom_call.1} parent=5 // pred_region
        %s168 = ssub.s32 %s18, 1
        // Predicated region
        $region13: #{tpu_custom_call.1} parent=11 // pred_check
          %p169 = pneg %p65
        $region14: #{tpu_custom_call.1} parent=11 // pred_check_branch
          %171 = sbr.rel (%p169) target = $region16
        $region15: #{tpu_custom_call.1} parent=11 // pred_region
          %173 = vsyncadd [#allocation6], 0
          %s175 = sshll.u32 %s1, 4
          %s176 = int_to_ptr.hbm [resolvable:$true] %s175
          %s177 = sshll.u32 [#allocation5], 4
          %s178 = int_to_ptr.vmem [resolvable:$true] %s177
          %180 = dma.hbm_to_vmem [thread:$0]  %s176, 16, %s178, [#allocation6]
        $region16: #{tpu_custom_call.1} parent=11 // pred_fallthru
          _
        // Predicated region
        $region17: #{tpu_custom_call.1} parent=11 // pred_check
          %p181 = pneg %p86
        $region18: #{tpu_custom_call.1} parent=11 // pred_check_branch
          %183 = sbr.rel (%p181) target = $region20
        $region19: #{tpu_custom_call.1} parent=11 // pred_region
          _
        $region20: #{tpu_custom_call.1} parent=11 // pred_fallthru
          _
        // Predicated region
        $region21: #{tpu_custom_call.1} parent=11 // pred_check
          %p184 = pneg %p107
        $region22: #{tpu_custom_call.1} parent=11 // pred_check_branch
          %186 = sbr.rel (%p184) target = $region24
        $region23: #{tpu_custom_call.1} parent=11 // pred_region
          %188 = vsyncadd [#allocation6], 0
          %s189 = sshll.u32 %s3, 4
          %s190 = int_to_ptr.hbm [resolvable:$true] %s189
          %s191 = sshll.u32 [#allocation7], 4
          %s192 = int_to_ptr.vmem [resolvable:$true] %s191
          %197 = dma.hbm_to_vmem [thread:$0]  %s190, 1024, %s192, [#allocation6], 64, 64, 4
        $region24: #{tpu_custom_call.1} parent=11 // pred_fallthru
          _
        // Predicated region
        $region25: #{tpu_custom_call.1} parent=11 // pred_check
          %p198 = pneg %p128
        $region26: #{tpu_custom_call.1} parent=11 // pred_check_branch
          %200 = sbr.rel (%p198) target = $region28
        $region27: #{tpu_custom_call.1} parent=11 // pred_region
          _
        $region28: #{tpu_custom_call.1} parent=11 // pred_fallthru
          _
      $region12: #{tpu_custom_call.1} parent=5 // pred_fallthru
        _
      %p201 = scmp.lt.s32.totalorder %s18, 8
      // Predicated region
      $region29: #{tpu_custom_call.1} parent=5 // pred_check
        %p202 = pneg %p201
      $region30: #{tpu_custom_call.1} parent=5 // pred_check_branch
        %204 = sbr.rel (%p202) target = $region32
      $region31: #{tpu_custom_call.1} parent=5 // pred_region
        // Predicated region
        $region33: #{tpu_custom_call.1} parent=31 // pred_check
          %p205 = pneg %p38
        $region34: #{tpu_custom_call.1} parent=31 // pred_check_branch
          %207 = sbr.rel (%p205) target = $region36
        $region35: #{tpu_custom_call.1} parent=31 // pred_region
          %s208 = sand.u32 %s28, 1
          %s209 = scalar_lea.sflag [#allocation3], %s208
          %s210 = sand.u32 %s28, 1
          %s211 = smul.addr %s210, 128
          %s212 = scalar_lea.vmem [#allocation2], %s211
          %s213 = smul.u32 16, %s18
          %215 = vsyncadd %s209, 0
          %s216 = smul.addr %s213, 8
          %s217 = scalar_lea.hbm %s0, %s216
          %s218 = sshll.u32 %s217, 4
          %s219 = int_to_ptr.hbm [resolvable:$true] %s218
          %s220 = sshll.u32 %s212, 4
          %s221 = int_to_ptr.vmem [resolvable:$true] %s220
          %226 = dma.hbm_to_vmem [thread:$0]  %s219, 2048, %s221, %s209, 128, 128, 8
        $region36: #{tpu_custom_call.1} parent=31 // pred_fallthru
          _
      $region32: #{tpu_custom_call.1} parent=5 // pred_fallthru
        _
      %p227 = scmp.le.s32.totalorder 1, %s18
      %p228 = scmp.lt.s32.totalorder %s18, 9
      %p229 = pnand %p227, %p228
      %p230 = pneg %p229
      // Predicated region
      $region37: #{tpu_custom_call.1} parent=5 // pred_check
        _
      $region38: #{tpu_custom_call.1} parent=5 // pred_check_branch
        %232 = sbr.rel (%p229) target = $region40
      $region39: #{tpu_custom_call.1} parent=5 // pred_region
        %s233 = ssub.s32 %s18, 1
        %s234 = sand.u32 %s31, 1
        %s235 = scalar_lea.sflag [#allocation3], %s234
        %s236 = sand.u32 %s31, 1
        %s237 = smul.addr %s236, 128
        %s238 = scalar_lea.vmem [#allocation2], %s237
        // Predicated region
        $region41: #{tpu_custom_call.1} parent=39 // pred_check
          %p239 = pneg %p44
        $region42: #{tpu_custom_call.1} parent=39 // pred_check_branch
          %241 = sbr.rel (%p239) target = $region44
        $region43: #{tpu_custom_call.1} parent=39 // pred_region
          %243 = dma.done %s235, 2048
        $region44: #{tpu_custom_call.1} parent=39 // pred_fallthru
          _
        // Predicated region
        $region45: #{tpu_custom_call.1} parent=39 // pred_check
          %p244 = pneg %p65
        $region46: #{tpu_custom_call.1} parent=39 // pred_check_branch
          %246 = sbr.rel (%p244) target = $region48
        $region47: #{tpu_custom_call.1} parent=39 // pred_region
          %248 = dma.done [#allocation6], 16
        $region48: #{tpu_custom_call.1} parent=39 // pred_fallthru
          _
        // Predicated region
        $region49: #{tpu_custom_call.1} parent=39 // pred_check
          %p249 = pneg %p107
        $region50: #{tpu_custom_call.1} parent=39 // pred_check_branch
          %251 = sbr.rel (%p249) target = $region52
        $region51: #{tpu_custom_call.1} parent=39 // pred_region
          %253 = dma.done [#allocation6], 1024
        $region52: #{tpu_custom_call.1} parent=39 // pred_fallthru
          _
        %s254 = sand.u32 %s31, 1
        %s255 = scalar_lea.sflag [#allocation3], %s254
        %s256 = sand.u32 %s31, 1
        %s257 = smul.addr %s256, 128
        %s258 = scalar_lea.vmem [#allocation2], %s257
        %p259 = pneg %p44
        %p260 = pneg %p41
        %p261 = pneg %p65
        %p262 = pneg %p62
        %p263 = pneg %p86
        %p264 = pneg %p83
        %p265 = pneg %p107
        %p266 = pneg %p104
        %p267 = pneg %p128
        %p268 = pneg %p125
        %p269 = pneg %p154
        %p270 = pneg %p151
        %s271 = sand.u32 %s141, 1
        %s272 = scalar_lea.sflag [#allocation4], %s271
        %s273 = sand.u32 %s141, 1
        %s274 = smul.addr %s273, 128
        %s275 = scalar_lea.vmem [#allocation8], %s274
        %s276 = smul.u32 16, %s23
        %s277 = smul.u32 16, %s23
        %v278 = vld [vmem:[%s238] sm:$0xff]
        %v279 = vld [vmem:[%s238 + $0x8] sm:$0xff]
        %v280 = vld [vmem:[%s238 + $0x10] sm:$0xff]
        %v281 = vld [vmem:[%s238 + $0x18] sm:$0xff]
        %v282 = vld [vmem:[%s238 + $0x20] sm:$0xff]
        %v283 = vld [vmem:[%s238 + $0x28] sm:$0xff]
        %v284 = vld [vmem:[%s238 + $0x30] sm:$0xff]
        %v285 = vld [vmem:[%s238 + $0x38] sm:$0xff]
        %v286 = vld [vmem:[%s238 + $0x40] sm:$0xff]
        %v287 = vld [vmem:[%s238 + $0x48] sm:$0xff]
        %v288 = vld [vmem:[%s238 + $0x50] sm:$0xff]
        %v289 = vld [vmem:[%s238 + $0x58] sm:$0xff]
        %v290 = vld [vmem:[%s238 + $0x60] sm:$0xff]
        %v291 = vld [vmem:[%s238 + $0x68] sm:$0xff]
        %v292 = vld [vmem:[%s238 + $0x70] sm:$0xff]
        %v293 = vld [vmem:[%s238 + $0x78] sm:$0xff]
        %294 = vadd.xlane.f32.xlu0 %v278
        %v295 = vpop.xlane.xlu0 %294
        %296 = vadd.xlane.f32.xlu0 %v279
        %v297 = vpop.xlane.xlu0 %296
        %298 = vadd.xlane.f32.xlu0 %v280
        %v299 = vpop.xlane.xlu0 %298
        %300 = vadd.xlane.f32.xlu0 %v281
        %v301 = vpop.xlane.xlu0 %300
        %302 = vadd.xlane.f32.xlu0 %v282
        %v303 = vpop.xlane.xlu0 %302
        %304 = vadd.xlane.f32.xlu0 %v283
        %v305 = vpop.xlane.xlu0 %304
        %306 = vadd.xlane.f32.xlu0 %v284
        %v307 = vpop.xlane.xlu0 %306
        %308 = vadd.xlane.f32.xlu0 %v285
        %v309 = vpop.xlane.xlu0 %308
        %310 = vadd.xlane.f32.xlu0 %v286
        %v311 = vpop.xlane.xlu0 %310
        %312 = vadd.xlane.f32.xlu0 %v287
        %v313 = vpop.xlane.xlu0 %312
        %314 = vadd.xlane.f32.xlu0 %v288
        %v315 = vpop.xlane.xlu0 %314
        %316 = vadd.xlane.f32.xlu0 %v289
        %v317 = vpop.xlane.xlu0 %316
        %318 = vadd.xlane.f32.xlu0 %v290
        %v319 = vpop.xlane.xlu0 %318
        %320 = vadd.xlane.f32.xlu0 %v291
        %v321 = vpop.xlane.xlu0 %320
        %322 = vadd.xlane.f32.xlu0 %v292
        %v323 = vpop.xlane.xlu0 %322
        %324 = vadd.xlane.f32.xlu0 %v293
        %v325 = vpop.xlane.xlu0 %324
        %v326 = vrcp.pop 128.0
        %v327 = vmul.f32 128.0, %v326
        %v328 = vsub.f32 1.0, %v327
        %v329 = vmul.f32 %v326, %v328
        %v330 = vadd.f32 %v326, %v329
        %vm331 = vweird.f32 %v326
        %v332 = vsel %vm331, %v326, %v330
        %v333 = vmul.f32 %v295, %v332
        %v334 = vmul.f32 %v297, %v332
        %v335 = vmul.f32 %v299, %v332
        %v336 = vmul.f32 %v301, %v332
        %v337 = vmul.f32 %v303, %v332
        %v338 = vmul.f32 %v305, %v332
        %v339 = vmul.f32 %v307, %v332
        %v340 = vmul.f32 %v309, %v332
        %v341 = vmul.f32 %v311, %v332
        %v342 = vmul.f32 %v313, %v332
        %v343 = vmul.f32 %v315, %v332
        %v344 = vmul.f32 %v317, %v332
        %v345 = vmul.f32 %v319, %v332
        %v346 = vmul.f32 %v321, %v332
        %v347 = vmul.f32 %v323, %v332
        %v348 = vmul.f32 %v325, %v332
        %v349 = vsub.f32 %v278, %v333
        %v350 = vsub.f32 %v279, %v334
        %v351 = vsub.f32 %v280, %v335
        %v352 = vsub.f32 %v281, %v336
        %v353 = vsub.f32 %v282, %v337
        %v354 = vsub.f32 %v283, %v338
        %v355 = vsub.f32 %v284, %v339
        %v356 = vsub.f32 %v285, %v340
        %v357 = vsub.f32 %v286, %v341
        %v358 = vsub.f32 %v287, %v342
        %v359 = vsub.f32 %v288, %v343
        %v360 = vsub.f32 %v289, %v344
        %v361 = vsub.f32 %v290, %v345
        %v362 = vsub.f32 %v291, %v346
        %v363 = vsub.f32 %v292, %v347
        %v364 = vsub.f32 %v293, %v348
        %v365 = vmul.f32 %v349, %v349
        %v366 = vmul.f32 %v350, %v350
        %v367 = vmul.f32 %v351, %v351
        %v368 = vmul.f32 %v352, %v352
        %v369 = vmul.f32 %v353, %v353
        %v370 = vmul.f32 %v354, %v354
        %v371 = vmul.f32 %v355, %v355
        %v372 = vmul.f32 %v356, %v356
        %v373 = vmul.f32 %v357, %v357
        %v374 = vmul.f32 %v358, %v358
        %v375 = vmul.f32 %v359, %v359
        %v376 = vmul.f32 %v360, %v360
        %v377 = vmul.f32 %v361, %v361
        %v378 = vmul.f32 %v362, %v362
        %v379 = vmul.f32 %v363, %v363
        %v380 = vmul.f32 %v364, %v364
        %381 = vadd.xlane.f32.xlu0 %v365
        %v382 = vpop.xlane.xlu0 %381
        %383 = vadd.xlane.f32.xlu0 %v366
        %v384 = vpop.xlane.xlu0 %383
        %385 = vadd.xlane.f32.xlu0 %v367
        %v386 = vpop.xlane.xlu0 %385
        %387 = vadd.xlane.f32.xlu0 %v368
        %v388 = vpop.xlane.xlu0 %387
        %389 = vadd.xlane.f32.xlu0 %v369
        %v390 = vpop.xlane.xlu0 %389
        %391 = vadd.xlane.f32.xlu0 %v370
        %v392 = vpop.xlane.xlu0 %391
        %393 = vadd.xlane.f32.xlu0 %v371
        %v394 = vpop.xlane.xlu0 %393
        %395 = vadd.xlane.f32.xlu0 %v372
        %v396 = vpop.xlane.xlu0 %395
        %397 = vadd.xlane.f32.xlu0 %v373
        %v398 = vpop.xlane.xlu0 %397
        %399 = vadd.xlane.f32.xlu0 %v374
        %v400 = vpop.xlane.xlu0 %399
        %401 = vadd.xlane.f32.xlu0 %v375
        %v402 = vpop.xlane.xlu0 %401
        %403 = vadd.xlane.f32.xlu0 %v376
        %v404 = vpop.xlane.xlu0 %403
        %405 = vadd.xlane.f32.xlu0 %v377
        %v406 = vpop.xlane.xlu0 %405
        %407 = vadd.xlane.f32.xlu0 %v378
        %v408 = vpop.xlane.xlu0 %407
        %409 = vadd.xlane.f32.xlu0 %v379
        %v410 = vpop.xlane.xlu0 %409
        %411 = vadd.xlane.f32.xlu0 %v380
        %v412 = vpop.xlane.xlu0 %411
        %v413 = vrcp.pop 127.0
        %v414 = vmul.f32 127.0, %v413
        %v415 = vsub.f32 1.0, %v414
        %v416 = vmul.f32 %v413, %v415
        %v417 = vadd.f32 %v413, %v416
        %vm418 = vweird.f32 %v413
        %v419 = vsel %vm418, %v413, %v417
        %v420 = vmul.f32 %v382, %v419
        %v421 = vmul.f32 %v384, %v419
        %v422 = vmul.f32 %v386, %v419
        %v423 = vmul.f32 %v388, %v419
        %v424 = vmul.f32 %v390, %v419
        %v425 = vmul.f32 %v392, %v419
        %v426 = vmul.f32 %v394, %v419
        %v427 = vmul.f32 %v396, %v419
        %v428 = vmul.f32 %v398, %v419
        %v429 = vmul.f32 %v400, %v419
        %v430 = vmul.f32 %v402, %v419
        %v431 = vmul.f32 %v404, %v419
        %v432 = vmul.f32 %v406, %v419
        %v433 = vmul.f32 %v408, %v419
        %v434 = vmul.f32 %v410, %v419
        %v435 = vmul.f32 %v412, %v419
        %v436 = vrsqrt.pop %v420
        %v437 = vmul.f32 %v436, %v420
        %v438 = vmul.f32 %v437, %v436
        %v439 = vmul.f32 0.5, %v438
        %v440 = vsub.f32 1.5, %v439
        %v441 = vmul.f32 %v436, %v440
        %v442 = vmul.f32 %v420, %v441
        %vm443 = vcmp.eq.f32.partialorder %v420, inf
        %v444 = vsel %vm443, %v420, %v442
        %vm445 = vcmp.eq.f32.partialorder %v420, 0.0
        %v446 = vand.u32 %v420, 2147483648
        %v447 = vsel %vm445, %v446, %v444
        %v448 = vrsqrt.pop %v421
        %v449 = vmul.f32 %v448, %v421
        %v450 = vmul.f32 %v449, %v448
        %v451 = vmul.f32 0.5, %v450
        %v452 = vsub.f32 1.5, %v451
        %v453 = vmul.f32 %v448, %v452
        %v454 = vmul.f32 %v421, %v453
        %vm455 = vcmp.eq.f32.partialorder %v421, inf
        %v456 = vsel %vm455, %v421, %v454
        %vm457 = vcmp.eq.f32.partialorder %v421, 0.0
        %v458 = vand.u32 %v421, 2147483648
        %v459 = vsel %vm457, %v458, %v456
        %v460 = vrsqrt.pop %v422
        %v461 = vmul.f32 %v460, %v422
        %v462 = vmul.f32 %v461, %v460
        %v463 = vmul.f32 0.5, %v462
        %v464 = vsub.f32 1.5, %v463
        %v465 = vmul.f32 %v460, %v464
        %v466 = vmul.f32 %v422, %v465
        %vm467 = vcmp.eq.f32.partialorder %v422, inf
        %v468 = vsel %vm467, %v422, %v466
        %vm469 = vcmp.eq.f32.partialorder %v422, 0.0
        %v470 = vand.u32 %v422, 2147483648
        %v471 = vsel %vm469, %v470, %v468
        %v472 = vrsqrt.pop %v423
        %v473 = vmul.f32 %v472, %v423
        %v474 = vmul.f32 %v473, %v472
        %v475 = vmul.f32 0.5, %v474
        %v476 = vsub.f32 1.5, %v475
        %v477 = vmul.f32 %v472, %v476
        %v478 = vmul.f32 %v423, %v477
        %vm479 = vcmp.eq.f32.partialorder %v423, inf
        %v480 = vsel %vm479, %v423, %v478
        %vm481 = vcmp.eq.f32.partialorder %v423, 0.0
        %v482 = vand.u32 %v423, 2147483648
        %v483 = vsel %vm481, %v482, %v480
        %v484 = vrsqrt.pop %v424
        %v485 = vmul.f32 %v484, %v424
        %v486 = vmul.f32 %v485, %v484
        %v487 = vmul.f32 0.5, %v486
        %v488 = vsub.f32 1.5, %v487
        %v489 = vmul.f32 %v484, %v488
        %v490 = vmul.f32 %v424, %v489
        %vm491 = vcmp.eq.f32.partialorder %v424, inf
        %v492 = vsel %vm491, %v424, %v490
        %vm493 = vcmp.eq.f32.partialorder %v424, 0.0
        %v494 = vand.u32 %v424, 2147483648
        %v495 = vsel %vm493, %v494, %v492
        %v496 = vrsqrt.pop %v425
        %v497 = vmul.f32 %v496, %v425
        %v498 = vmul.f32 %v497, %v496
        %v499 = vmul.f32 0.5, %v498
        %v500 = vsub.f32 1.5, %v499
        %v501 = vmul.f32 %v496, %v500
        %v502 = vmul.f32 %v425, %v501
        %vm503 = vcmp.eq.f32.partialorder %v425, inf
        %v504 = vsel %vm503, %v425, %v502
        %vm505 = vcmp.eq.f32.partialorder %v425, 0.0
        %v506 = vand.u32 %v425, 2147483648
        %v507 = vsel %vm505, %v506, %v504
        %v508 = vrsqrt.pop %v426
        %v509 = vmul.f32 %v508, %v426
        %v510 = vmul.f32 %v509, %v508
        %v511 = vmul.f32 0.5, %v510
        %v512 = vsub.f32 1.5, %v511
        %v513 = vmul.f32 %v508, %v512
        %v514 = vmul.f32 %v426, %v513
        %vm515 = vcmp.eq.f32.partialorder %v426, inf
        %v516 = vsel %vm515, %v426, %v514
        %vm517 = vcmp.eq.f32.partialorder %v426, 0.0
        %v518 = vand.u32 %v426, 2147483648
        %v519 = vsel %vm517, %v518, %v516
        %v520 = vrsqrt.pop %v427
        %v521 = vmul.f32 %v520, %v427
        %v522 = vmul.f32 %v521, %v520
        %v523 = vmul.f32 0.5, %v522
        %v524 = vsub.f32 1.5, %v523
        %v525 = vmul.f32 %v520, %v524
        %v526 = vmul.f32 %v427, %v525
        %vm527 = vcmp.eq.f32.partialorder %v427, inf
        %v528 = vsel %vm527, %v427, %v526
        %vm529 = vcmp.eq.f32.partialorder %v427, 0.0
        %v530 = vand.u32 %v427, 2147483648
        %v531 = vsel %vm529, %v530, %v528
        %v532 = vrsqrt.pop %v428
        %v533 = vmul.f32 %v532, %v428
        %v534 = vmul.f32 %v533, %v532
        %v535 = vmul.f32 0.5, %v534
        %v536 = vsub.f32 1.5, %v535
        %v537 = vmul.f32 %v532, %v536
        %v538 = vmul.f32 %v428, %v537
        %vm539 = vcmp.eq.f32.partialorder %v428, inf
        %v540 = vsel %vm539, %v428, %v538
        %vm541 = vcmp.eq.f32.partialorder %v428, 0.0
        %v542 = vand.u32 %v428, 2147483648
        %v543 = vsel %vm541, %v542, %v540
        %v544 = vrsqrt.pop %v429
        %v545 = vmul.f32 %v544, %v429
        %v546 = vmul.f32 %v545, %v544
        %v547 = vmul.f32 0.5, %v546
        %v548 = vsub.f32 1.5, %v547
        %v549 = vmul.f32 %v544, %v548
        %v550 = vmul.f32 %v429, %v549
        %vm551 = vcmp.eq.f32.partialorder %v429, inf
        %v552 = vsel %vm551, %v429, %v550
        %vm553 = vcmp.eq.f32.partialorder %v429, 0.0
        %v554 = vand.u32 %v429, 2147483648
        %v555 = vsel %vm553, %v554, %v552
        %v556 = vrsqrt.pop %v430
        %v557 = vmul.f32 %v556, %v430
        %v558 = vmul.f32 %v557, %v556
        %v559 = vmul.f32 0.5, %v558
        %v560 = vsub.f32 1.5, %v559
        %v561 = vmul.f32 %v556, %v560
        %v562 = vmul.f32 %v430, %v561
        %vm563 = vcmp.eq.f32.partialorder %v430, inf
        %v564 = vsel %vm563, %v430, %v562
        %vm565 = vcmp.eq.f32.partialorder %v430, 0.0
        %v566 = vand.u32 %v430, 2147483648
        %v567 = vsel %vm565, %v566, %v564
        %v568 = vrsqrt.pop %v431
        %v569 = vmul.f32 %v568, %v431
        %v570 = vmul.f32 %v569, %v568
        %v571 = vmul.f32 0.5, %v570
        %v572 = vsub.f32 1.5, %v571
        %v573 = vmul.f32 %v568, %v572
        %v574 = vmul.f32 %v431, %v573
        %vm575 = vcmp.eq.f32.partialorder %v431, inf
        %v576 = vsel %vm575, %v431, %v574
        %vm577 = vcmp.eq.f32.partialorder %v431, 0.0
        %v578 = vand.u32 %v431, 2147483648
        %v579 = vsel %vm577, %v578, %v576
        %v580 = vrsqrt.pop %v432
        %v581 = vmul.f32 %v580, %v432
        %v582 = vmul.f32 %v581, %v580
        %v583 = vmul.f32 0.5, %v582
        %v584 = vsub.f32 1.5, %v583
        %v585 = vmul.f32 %v580, %v584
        %v586 = vmul.f32 %v432, %v585
        %vm587 = vcmp.eq.f32.partialorder %v432, inf
        %v588 = vsel %vm587, %v432, %v586
        %vm589 = vcmp.eq.f32.partialorder %v432, 0.0
        %v590 = vand.u32 %v432, 2147483648
        %v591 = vsel %vm589, %v590, %v588
        %v592 = vrsqrt.pop %v433
        %v593 = vmul.f32 %v592, %v433
        %v594 = vmul.f32 %v593, %v592
        %v595 = vmul.f32 0.5, %v594
        %v596 = vsub.f32 1.5, %v595
        %v597 = vmul.f32 %v592, %v596
        %v598 = vmul.f32 %v433, %v597
        %vm599 = vcmp.eq.f32.partialorder %v433, inf
        %v600 = vsel %vm599, %v433, %v598
        %vm601 = vcmp.eq.f32.partialorder %v433, 0.0
        %v602 = vand.u32 %v433, 2147483648
        %v603 = vsel %vm601, %v602, %v600
        %v604 = vrsqrt.pop %v434
        %v605 = vmul.f32 %v604, %v434
        %v606 = vmul.f32 %v605, %v604
        %v607 = vmul.f32 0.5, %v606
        %v608 = vsub.f32 1.5, %v607
        %v609 = vmul.f32 %v604, %v608
        %v610 = vmul.f32 %v434, %v609
        %vm611 = vcmp.eq.f32.partialorder %v434, inf
        %v612 = vsel %vm611, %v434, %v610
        %vm613 = vcmp.eq.f32.partialorder %v434, 0.0
        %v614 = vand.u32 %v434, 2147483648
        %v615 = vsel %vm613, %v614, %v612
        %v616 = vrsqrt.pop %v435
        %v617 = vmul.f32 %v616, %v435
        %v618 = vmul.f32 %v617, %v616
        %v619 = vmul.f32 0.5, %v618
        %v620 = vsub.f32 1.5, %v619
        %v621 = vmul.f32 %v616, %v620
        %v622 = vmul.f32 %v435, %v621
        %vm623 = vcmp.eq.f32.partialorder %v435, inf
        %v624 = vsel %vm623, %v435, %v622
        %vm625 = vcmp.eq.f32.partialorder %v435, 0.0
        %v626 = vand.u32 %v435, 2147483648
        %v627 = vsel %vm625, %v626, %v624
        %v628 = vadd.f32 %v447, 1e-06
        %v629 = vadd.f32 %v459, 1e-06
        %v630 = vadd.f32 %v471, 1e-06
        %v631 = vadd.f32 %v483, 1e-06
        %v632 = vadd.f32 %v495, 1e-06
        %v633 = vadd.f32 %v507, 1e-06
        %v634 = vadd.f32 %v519, 1e-06
        %v635 = vadd.f32 %v531, 1e-06
        %v636 = vadd.f32 %v543, 1e-06
        %v637 = vadd.f32 %v555, 1e-06
        %v638 = vadd.f32 %v567, 1e-06
        %v639 = vadd.f32 %v579, 1e-06
        %v640 = vadd.f32 %v591, 1e-06
        %v641 = vadd.f32 %v603, 1e-06
        %v642 = vadd.f32 %v615, 1e-06
        %v643 = vadd.f32 %v627, 1e-06
        %v644 = vrcp.pop %v628
        %v645 = vrcp.pop %v629
        %v646 = vrcp.pop %v630
        %v647 = vrcp.pop %v631
        %v648 = vrcp.pop %v632
        %v649 = vrcp.pop %v633
        %v650 = vrcp.pop %v634
        %v651 = vrcp.pop %v635
        %v652 = vrcp.pop %v636
        %v653 = vrcp.pop %v637
        %v654 = vrcp.pop %v638
        %v655 = vrcp.pop %v639
        %v656 = vrcp.pop %v640
        %v657 = vrcp.pop %v641
        %v658 = vrcp.pop %v642
        %v659 = vrcp.pop %v643
        %v660 = vld [vmem:[#allocation5] sm:$0x1]
        %v661 = vmul.f32 %v349, %v644
        %v662 = vmul.f32 %v350, %v645
        %v663 = vmul.f32 %v351, %v646
        %v664 = vmul.f32 %v352, %v647
        %v665 = vmul.f32 %v353, %v648
        %v666 = vmul.f32 %v354, %v649
        %v667 = vmul.f32 %v355, %v650
        %v668 = vmul.f32 %v356, %v651
        %v669 = vmul.f32 %v357, %v652
        %v670 = vmul.f32 %v358, %v653
        %v671 = vmul.f32 %v359, %v654
        %v672 = vmul.f32 %v360, %v655
        %v673 = vmul.f32 %v361, %v656
        %v674 = vmul.f32 %v362, %v657
        %v675 = vmul.f32 %v363, %v658
        %v676 = vmul.f32 %v364, %v659
        %v678 = vperm.slane %v660, 0
        %v680 = vmul.f32 %v678, %v661
        %v681 = vmul.f32 %v678, %v662
        %v682 = vmul.f32 %v678, %v663
        %v683 = vmul.f32 %v678, %v664
        %v684 = vmul.f32 %v678, %v665
        %v685 = vmul.f32 %v678, %v666
        %v686 = vmul.f32 %v678, %v667
        %v687 = vmul.f32 %v678, %v668
        %v688 = vmul.f32 %v678, %v669
        %v689 = vmul.f32 %v678, %v670
        %v690 = vmul.f32 %v678, %v671
        %v691 = vmul.f32 %v678, %v672
        %v692 = vmul.f32 %v678, %v673
        %v693 = vmul.f32 %v678, %v674
        %v694 = vmul.f32 %v678, %v675
        %v695 = vmul.f32 %v678, %v676
        %v696 = vld [vmem:[%s2] sm:$0x1]
        %v698 = vperm.slane %v696, 0
        %v700 = vadd.f32 %v680, %v698
        %v701 = vadd.f32 %v681, %v698
        %v702 = vadd.f32 %v682, %v698
        %v703 = vadd.f32 %v683, %v698
        %v704 = vadd.f32 %v684, %v698
        %v705 = vadd.f32 %v685, %v698
        %v706 = vadd.f32 %v686, %v698
        %v707 = vadd.f32 %v687, %v698
        %v708 = vadd.f32 %v688, %v698
        %v709 = vadd.f32 %v689, %v698
        %v710 = vadd.f32 %v690, %v698
        %v711 = vadd.f32 %v691, %v698
        %v712 = vadd.f32 %v692, %v698
        %v713 = vadd.f32 %v693, %v698
        %v714 = vadd.f32 %v694, %v698
        %v715 = vadd.f32 %v695, %v698
        %v716 = vpack.c.bf16 %v701, %v700
        %v717 = vpack.c.bf16 %v703, %v702
        %v718 = vpack.c.bf16 %v705, %v704
        %v719 = vpack.c.bf16 %v707, %v706
        %v720 = vpack.c.bf16 %v709, %v708
        %v721 = vpack.c.bf16 %v711, %v710
        %v722 = vpack.c.bf16 %v713, %v712
        %v723 = vpack.c.bf16 %v715, %v714
        %v724 = vld [vmem:[#allocation7] sm:$0xf]
        %v725 = vld [vmem:[#allocation7 + $0x4] sm:$0xf]
        %v726 = vld [vmem:[#allocation7 + $0x8] sm:$0xf]
        %v727 = vld [vmem:[#allocation7 + $0xc] sm:$0xf]
        %v728 = vld [vmem:[#allocation7 + $0x10] sm:$0xf]
        %v729 = vld [vmem:[#allocation7 + $0x14] sm:$0xf]
        %v730 = vld [vmem:[#allocation7 + $0x18] sm:$0xf]
        %v731 = vld [vmem:[#allocation7 + $0x1c] sm:$0xf]
        %v732 = vld [vmem:[#allocation7 + $0x20] sm:$0xf]
        %v733 = vld [vmem:[#allocation7 + $0x24] sm:$0xf]
        %v734 = vld [vmem:[#allocation7 + $0x28] sm:$0xf]
        %v735 = vld [vmem:[#allocation7 + $0x2c] sm:$0xf]
        %v736 = vld [vmem:[#allocation7 + $0x30] sm:$0xf]
        %v737 = vld [vmem:[#allocation7 + $0x34] sm:$0xf]
        %v738 = vld [vmem:[#allocation7 + $0x38] sm:$0xf]
        %v739 = vld [vmem:[#allocation7 + $0x3c] sm:$0xf]
        %v740 = vld [vmem:[%s4] sm:$0x1]
        %v742 = vperm.slane %v740, 0
        %v760 = vunpack.c.l.b16 %v724
        %v761 = vunpack.c.l.b16 %v725
        %v762 = vunpack.c.l.b16 %v726
        %v763 = vunpack.c.l.b16 %v727
        %v764 = vunpack.c.l.b16 %v728
        %v765 = vunpack.c.l.b16 %v729
        %v766 = vunpack.c.l.b16 %v730
        %v767 = vunpack.c.l.b16 %v731
        %v768 = vunpack.c.l.b16 %v732
        %v769 = vunpack.c.l.b16 %v733
        %v770 = vunpack.c.l.b16 %v734
        %v771 = vunpack.c.l.b16 %v735
        %v772 = vunpack.c.l.b16 %v736
        %v773 = vunpack.c.l.b16 %v737
        %v774 = vunpack.c.l.b16 %v738
        %v775 = vunpack.c.l.b16 %v739
        %v776 = vpack.c.b16 %v761, %v760
        %v777 = vpack.c.b16 %v763, %v762
        %v778 = vpack.c.b16 %v765, %v764
        %v779 = vpack.c.b16 %v767, %v766
        %v780 = vpack.c.b16 %v769, %v768
        %v781 = vpack.c.b16 %v771, %v770
        %v782 = vpack.c.b16 %v773, %v772
        %v783 = vpack.c.b16 %v775, %v774
        %792 = vmatpush.bf16.msra.mxu0 %v783
        %793 = vmatpush.bf16.msra.mxu0 %v782
        %794 = vmatpush.bf16.msra.mxu0 %v781
        %795 = vmatpush.bf16.msra.mxu0 %v780
        %796 = vmatpush.bf16.msra.mxu0 %v779
        %797 = vmatpush.bf16.msra.mxu0 %v778
        %798 = vmatpush.bf16.msra.mxu0 %v777
        %799 = vmatpush.bf16.msra.mxu0 %v776
        %800 = vmatmul.bf16.gmra.mxu0 %v716
        %v801 = vpop.f32.mrf.mxu0
        %v802 = vadd.f32 %v742, %v801
        %v803 = vpop.f32.mrf.mxu0
        %v804 = vadd.f32 %v742, %v803
        %805 = vmatmul.bf16.gmra.mxu0 %v717
        %v806 = vpop.f32.mrf.mxu0
        %v807 = vadd.f32 %v742, %v806
        %v808 = vpop.f32.mrf.mxu0
        %v809 = vadd.f32 %v742, %v808
        %810 = vmatmul.bf16.gmra.mxu0 %v718
        %v811 = vpop.f32.mrf.mxu0
        %v812 = vadd.f32 %v742, %v811
        %v813 = vpop.f32.mrf.mxu0
        %v814 = vadd.f32 %v742, %v813
        %815 = vmatmul.bf16.gmra.mxu0 %v719
        %v816 = vpop.f32.mrf.mxu0
        %v817 = vadd.f32 %v742, %v816
        %v818 = vpop.f32.mrf.mxu0
        %v819 = vadd.f32 %v742, %v818
        %820 = vmatmul.bf16.gmra.mxu0 %v720
        %v821 = vpop.f32.mrf.mxu0
        %v822 = vadd.f32 %v742, %v821
        %v823 = vpop.f32.mrf.mxu0
        %v824 = vadd.f32 %v742, %v823
        %825 = vmatmul.bf16.gmra.mxu0 %v721
        %v826 = vpop.f32.mrf.mxu0
        %v827 = vadd.f32 %v742, %v826
        %v828 = vpop.f32.mrf.mxu0
        %v829 = vadd.f32 %v742, %v828
        %830 = vmatmul.bf16.gmra.mxu0 %v722
        %v831 = vpop.f32.mrf.mxu0
        %v832 = vadd.f32 %v742, %v831
        %v833 = vpop.f32.mrf.mxu0
        %v834 = vadd.f32 %v742, %v833
        %835 = vmatmul.bf16.gmra.mxu0 %v723
        %v836 = vpop.f32.mrf.mxu0
        %v837 = vadd.f32 %v742, %v836
        %v838 = vpop.f32.mrf.mxu0
        %v839 = vadd.f32 %v742, %v838
        %840 = vdwg.mxu0
        %v841 = vadd.f32 %v278, %v802
        %v842 = vadd.f32 %v279, %v804
        %v843 = vadd.f32 %v280, %v807
        %v844 = vadd.f32 %v281, %v809
        %v845 = vadd.f32 %v282, %v812
        %v846 = vadd.f32 %v283, %v814
        %v847 = vadd.f32 %v284, %v817
        %v848 = vadd.f32 %v285, %v819
        %v849 = vadd.f32 %v286, %v822
        %v850 = vadd.f32 %v287, %v824
        %v851 = vadd.f32 %v288, %v827
        %v852 = vadd.f32 %v289, %v829
        %v853 = vadd.f32 %v290, %v832
        %v854 = vadd.f32 %v291, %v834
        %v855 = vadd.f32 %v292, %v837
        %v856 = vadd.f32 %v293, %v839
        %857 = vst [vmem:[%s275] sm:$0xff] %v841
        %858 = vst [vmem:[%s275 + $0x8] sm:$0xff] %v842
        %859 = vst [vmem:[%s275 + $0x10] sm:$0xff] %v843
        %860 = vst [vmem:[%s275 + $0x18] sm:$0xff] %v844
        %861 = vst [vmem:[%s275 + $0x20] sm:$0xff] %v845
        %862 = vst [vmem:[%s275 + $0x28] sm:$0xff] %v846
        %863 = vst [vmem:[%s275 + $0x30] sm:$0xff] %v847
        %864 = vst [vmem:[%s275 + $0x38] sm:$0xff] %v848
        %865 = vst [vmem:[%s275 + $0x40] sm:$0xff] %v849
        %866 = vst [vmem:[%s275 + $0x48] sm:$0xff] %v850
        %867 = vst [vmem:[%s275 + $0x50] sm:$0xff] %v851
        %868 = vst [vmem:[%s275 + $0x58] sm:$0xff] %v852
        %869 = vst [vmem:[%s275 + $0x60] sm:$0xff] %v853
        %870 = vst [vmem:[%s275 + $0x68] sm:$0xff] %v854
        %871 = vst [vmem:[%s275 + $0x70] sm:$0xff] %v855
        %872 = vst [vmem:[%s275 + $0x78] sm:$0xff] %v856
        %s873 = sand.u32 %s141, 1
        %s874 = scalar_lea.sflag [#allocation4], %s873
        %s875 = sand.u32 %s141, 1
        %s876 = smul.addr %s875, 128
        %s877 = scalar_lea.vmem [#allocation8], %s876
        // Predicated region
        $region53: #{tpu_custom_call.1} parent=39 // pred_check
          %p878 = pneg %p151
        $region54: #{tpu_custom_call.1} parent=39 // pred_check_branch
          %880 = sbr.rel (%p878) target = $region56
        $region55: #{tpu_custom_call.1} parent=39 // pred_region
          %s881 = smul.u32 16, %s23
          %883 = vsyncadd %s874, 0
          %s884 = smul.addr %s881, 8
          %s885 = scalar_lea.hbm %s5, %s884
          %s886 = sshll.u32 %s877, 4
          %s887 = int_to_ptr.vmem [resolvable:$true] %s886
          %s888 = sshll.u32 %s885, 4
          %s889 = int_to_ptr.hbm [resolvable:$true] %s888
          %894 = dma.vmem_to_hbm [thread:$0]  %s887, 2048, %s889, %s874, 128, 128, 8
        $region56: #{tpu_custom_call.1} parent=39 // pred_fallthru
          _
      $region40: #{tpu_custom_call.1} parent=5 // pred_fallthru
        _
      %p895 = scmp.le.s32.totalorder 2, %s18
      // Predicated region
      $region57: #{tpu_custom_call.1} parent=5 // pred_check
        %p896 = pneg %p895
      $region58: #{tpu_custom_call.1} parent=5 // pred_check_branch
        %898 = sbr.rel (%p896) target = $region60
      $region59: #{tpu_custom_call.1} parent=5 // pred_region
        %s899 = ssub.s32 %s18, 2
        // Predicated region
        $region61: #{tpu_custom_call.1} parent=59 // pred_check
          %p900 = pneg %p157
        $region62: #{tpu_custom_call.1} parent=59 // pred_check_branch
          %902 = sbr.rel (%p900) target = $region64
        $region63: #{tpu_custom_call.1} parent=59 // pred_region
          %s903 = sand.u32 %s142, 1
          %s904 = scalar_lea.sflag [#allocation4], %s903
          %s905 = sand.u32 %s142, 1
          %s906 = smul.addr %s905, 128
          %s907 = scalar_lea.vmem [#allocation8], %s906
          %909 = dma.done %s904, 2048
        $region64: #{tpu_custom_call.1} parent=59 // pred_fallthru
          _
      $region60: #{tpu_custom_call.1} parent=5 // pred_fallthru
        _
    $region6: #{tpu_custom_call.1} parent=1 // loop_footer
      %s22 = sadd.s32 1, %s18
    $region7: #{tpu_custom_call.1} parent=1 // loop_footer_branch
      %17 = sbr.rel target = $region3
    $region8: #{tpu_custom_call.1} parent=1 // loop_exit
      _
    %910 = vsyncpa [#allocation3], 1
    %s911 = scalar_lea.sflag [#allocation3], 1
    %912 = vsyncpa %s911, 1
    %913 = vsyncpa [#allocation6], 1
    %914 = vsyncpa [#allocation4], 1
    %s915 = scalar_lea.sflag [#allocation4], 1
    %916 = vsyncpa %s915, 1

// kernel: tpu_custom_call.1
$region0: #{tpu_custom_call.1}
  #allocation0 [shape = 'u32[]', space=smem, size = 0x4, offset = 0x4, fixed_abs, tag = 'smem constant byte address 0x4 - core index']
  #allocation1 [shape = 'u32[72,128]{1,0:T(1,128)}', space=vmem, size = 0x9000, scoped, tag = 'internal scratch']
  %s0 = inlined_call_operand.hbm [shape: f32[1024,128], index: 0, kind: input, shape index: {}]
  %s1 = inlined_call_operand.hbm [shape: f32[1,128], index: 1, kind: input, shape index: {}]
  %s2 = inlined_call_operand.vmem [shape: f32[1,128], index: 2, kind: input, shape index: {}]
  %s3 = inlined_call_operand.hbm [shape: bf16[128,128], index: 3, kind: input, shape index: {}]
  %s4 = inlined_call_operand.vmem [shape: f32[1,128], index: 4, kind: input, shape index: {}]
  %s5 = inlined_call_operand.hbm [shape: f32[1024,128], index: 5, kind: output, shape index: {}]
  %s6 = sld [smem:[#allocation0]]
  $region65: #{tpu_custom_call.1} parent=0
    _
  %s8 = ssub.s32 1, %s6
  %s9 = scalar_select 0, %s8, %s6
  $region1: #{tpu_custom_call.1} parent=0
    #allocation2 [shape = 'u8[131072]{0}', space=vmem, size = 0x20000, scoped, tag = 'input window, operand 0']
    #allocation3 [shape = 's32[2]{0}', space=sflag, size = 0x8, scoped, tag = 'scoped memory for tpu_custom_call.1']
    #allocation4 [shape = 's32[2]{0}', space=sflag, size = 0x8, scoped, tag = 'scoped memory for tpu_custom_call.1']
    #allocation5 [shape = 'u8[512]{0}', space=vmem, size = 0x400, scoped, tag = 'input window, operand 1, single buffered']
    #allocation6 [shape = 's32[1]{0}', space=sflag, size = 0x4, scoped, tag = 'scoped memory for tpu_custom_call.1']
    #allocation7 [shape = 'u8[32768]{0}', space=vmem, size = 0x8000, scoped, tag = 'input window, operand 3, single buffered']
    #allocation8 [shape = 'u8[131072]{0}', space=vmem, size = 0x20000, scoped, tag = 'output window, operand 0']
    %10 = vsyncpa [#allocation3], 0
    %s11 = scalar_lea.sflag [#allocation3], 1
    %12 = vsyncpa %s11, 0
    %13 = vsyncpa [#allocation6], 0
    %14 = vsyncpa [#allocation4], 0
    %s15 = scalar_lea.sflag [#allocation4], 1
    %16 = vsyncpa %s15, 0
    loop: start=0, step=1, limit=10
    $region2: #{tpu_custom_call.1} parent=1 // loop_pre_header
      _
    $region3: #{tpu_custom_call.1} parent=1 // loop_header
      %s18 = sphi 0, %s22
      %p19 = scmp.ge.s32.totalorder %s18, 10
      %s28 = sphi 0, %s30
      %s31 = sphi 0, %s28
      %s32 = sphi 0, %s31
      %s48 = sphi 0, %s32
      %s52 = sphi 0, %s52
      %s54 = sphi 0, %s52
      %s55 = sphi 0, %s54
      %s69 = sphi 0, %s55
      %s73 = sphi 0, %s73
      %s75 = sphi 0, %s73
      %s76 = sphi 0, %s75
      %s90 = sphi 0, %s76
      %s94 = sphi 0, %s94
      %s96 = sphi 0, %s94
      %s97 = sphi 0, %s96
      %s111 = sphi 0, %s97
      %s115 = sphi 0, %s115
      %s117 = sphi 0, %s115
      %s118 = sphi 0, %s117
      %s132 = sphi 0, %s118
      %s138 = sphi 0, %s140
      %s141 = sphi 0, %s138
      %s142 = sphi 0, %s141
      %s158 = sphi 0, %s142
    $region4: #{tpu_custom_call.1} parent=1 // loop_header_branch
      %21 = sbr.rel (%p19) target = $region8
    $region5: #{tpu_custom_call.1} parent=1 // loop_body
      %s23 = ssub.s32 %s18, 1
      %s24 = ssub.s32 %s18, 2
      %s25 = sadd.s32 %s18, 1
      %s26 = ssub.s32 %s18, %s25
      %p27 = scmp.eq.s32.totalorder %s26, 0
      %s29 = sadd.s32 %s28, 1
      %s30 = scalar_select %p27, %s28, %s29
      %p33 = pneg %p27
      %p34 = scmp.eq.s32.totalorder %s18, 7
      %p35 = por %p33, %p34
      %p36 = scmp.ne.s32.totalorder %s28, %s31
      %p37 = scmp.eq.s32.totalorder %s18, 0
      %p38 = por %p36, %p37
      %p39 = scmp.ne.s32.totalorder %s28, %s31
      %p40 = scmp.eq.s32.totalorder %s23, 7
      %p41 = por %p39, %p40
      %p42 = scmp.ne.s32.totalorder %s31, %s32
      %p43 = scmp.eq.s32.totalorder %s23, 0
      %p44 = por %p42, %p43
      %p45 = scmp.ne.s32.totalorder %s31, %s32
      %p46 = scmp.eq.s32.totalorder %s24, 7
      %p47 = por %p45, %p46
      %p49 = scmp.ne.s32.totalorder %s32, %s48
      %p50 = scmp.eq.s32.totalorder %s24, 0
      %p51 = por %p49, %p50
      %s53 = sadd.s32 %s52, 1
      %p56 = scmp.eq.s32.totalorder %s18, 7
      %p57 = scmp.ne.s32.totalorder %s52, %s54
      %p58 = scmp.eq.s32.totalorder %s18, 0
      %p59 = por %p57, %p58
      %p60 = scmp.ne.s32.totalorder %s52, %s54
      %p61 = scmp.eq.s32.totalorder %s23, 7
      %p62 = por %p60, %p61
      %p63 = scmp.ne.s32.totalorder %s54, %s55
      %p64 = scmp.eq.s32.totalorder %s23, 0
      %p65 = por %p63, %p64
      %p66 = scmp.ne.s32.totalorder %s54, %s55
      %p67 = scmp.eq.s32.totalorder %s24, 7
      %p68 = por %p66, %p67
      %p70 = scmp.ne.s32.totalorder %s55, %s69
      %p71 = scmp.eq.s32.totalorder %s24, 0
      %p72 = por %p70, %p71
      %s74 = sadd.s32 %s73, 1
      %p77 = scmp.eq.s32.totalorder %s18, 7
      %p78 = scmp.ne.s32.totalorder %s73, %s75
      %p79 = scmp.eq.s32.totalorder %s18, 0
      %p80 = por %p78, %p79
      %p81 = scmp.ne.s32.totalorder %s73, %s75
      %p82 = scmp.eq.s32.totalorder %s23, 7
      %p83 = por %p81, %p82
      %p84 = scmp.ne.s32.totalorder %s75, %s76
      %p85 = scmp.eq.s32.totalorder %s23, 0
      %p86 = por %p84, %p85
      %p87 = scmp.ne.s32.totalorder %s75, %s76
      %p88 = scmp.eq.s32.totalorder %s24, 7
      %p89 = por %p87, %p88
      %p91 = scmp.ne.s32.totalorder %s76, %s90
      %p92 = scmp.eq.s32.totalorder %s24, 0
      %p93 = por %p91, %p92
      %s95 = sadd.s32 %s94, 1
      %p98 = scmp.eq.s32.totalorder %s18, 7
      %p99 = scmp.ne.s32.totalorder %s94, %s96
      %p100 = scmp.eq.s32.totalorder %s18, 0
      %p101 = por %p99, %p100
      %p102 = scmp.ne.s32.totalorder %s94, %s96
      %p103 = scmp.eq.s32.totalorder %s23, 7
      %p104 = por %p102, %p103
      %p105 = scmp.ne.s32.totalorder %s96, %s97
      %p106 = scmp.eq.s32.totalorder %s23, 0
      %p107 = por %p105, %p106
      %p108 = scmp.ne.s32.totalorder %s96, %s97
      %p109 = scmp.eq.s32.totalorder %s24, 7
      %p110 = por %p108, %p109
      %p112 = scmp.ne.s32.totalorder %s97, %s111
      %p113 = scmp.eq.s32.totalorder %s24, 0
      %p114 = por %p112, %p113
      %s116 = sadd.s32 %s115, 1
      %p119 = scmp.eq.s32.totalorder %s18, 7
      %p120 = scmp.ne.s32.totalorder %s115, %s117
      %p121 = scmp.eq.s32.totalorder %s18, 0
      %p122 = por %p120, %p121
      %p123 = scmp.ne.s32.totalorder %s115, %s117
      %p124 = scmp.eq.s32.totalorder %s23, 7
      %p125 = por %p123, %p124
      %p126 = scmp.ne.s32.totalorder %s117, %s118
      %p127 = scmp.eq.s32.totalorder %s23, 0
      %p128 = por %p126, %p127
      %p129 = scmp.ne.s32.totalorder %s117, %s118
      %p130 = scmp.eq.s32.totalorder %s24, 7
      %p131 = por %p129, %p130
      %p133 = scmp.ne.s32.totalorder %s118, %s132
      %p134 = scmp.eq.s32.totalorder %s24, 0
      %p135 = por %p133, %p134
      %s136 = ssub.s32 %s18, %s25
      %p137 = scmp.eq.s32.totalorder %s136, 0
      %s139 = sadd.s32 %s138, 1
      %s140 = scalar_select %p137, %s138, %s139
      %p143 = pneg %p137
      %p144 = scmp.eq.s32.totalorder %s18, 7
      %p145 = por %p143, %p144
      %p146 = scmp.ne.s32.totalorder %s138, %s141
      %p147 = scmp.eq.s32.totalorder %s18, 0
      %p148 = por %p146, %p147
      %p149 = scmp.ne.s32.totalorder %s138, %s141
      %p150 = scmp.eq.s32.totalorder %s23, 7
      %p151 = por %p149, %p150
      %p152 = scmp.ne.s32.totalorder %s141, %s142
      %p153 = scmp.eq.s32.totalorder %s23, 0
      %p154 = por %p152, %p153
      %p155 = scmp.ne.s32.totalorder %s141, %s142
      %p156 = scmp.eq.s32.totalorder %s24, 7
      %p157 = por %p155, %p156
      %p159 = scmp.ne.s32.totalorder %s142, %s158
      %p160 = scmp.eq.s32.totalorder %s24, 0
      %p161 = por %p159, %p160
      %p162 = scmp.le.s32.totalorder 1, %s18
      %p163 = scmp.lt.s32.totalorder %s18, 9
      %p164 = pnand %p162, %p163
      %p165 = pneg %p164
      // Predicated region
      $region9: #{tpu_custom_call.1} parent=5 // pred_check
        _
      $region10: #{tpu_custom_call.1} parent=5 // pred_check_branch
        %167 = sbr.rel (%p164) target = $region12
      $region11: #{tpu_custom_call.1} parent=5 // pred_region
        %s168 = ssub.s32 %s18, 1
        // Predicated region
        $region13: #{tpu_custom_call.1} parent=11 // pred_check
          %p169 = pneg %p65
        $region14: #{tpu_custom_call.1} parent=11 // pred_check_branch
          %171 = sbr.rel (%p169) target = $region16
        $region15: #{tpu_custom_call.1} parent=11 // pred_region
          %173 = vsyncadd [#allocation6], 0
          %s175 = sshll.u32 %s1, 4
          %s176 = int_to_ptr.hbm [resolvable:$true] %s175
          %s177 = sshll.u32 [#allocation5], 4
          %s178 = int_to_ptr.vmem [resolvable:$true] %s177
          %180 = dma.hbm_to_vmem [thread:$0]  %s176, 16, %s178, [#allocation6]
        $region16: #{tpu_custom_call.1} parent=11 // pred_fallthru
          _
        // Predicated region
        $region17: #{tpu_custom_call.1} parent=11 // pred_check
          %p181 = pneg %p86
        $region18: #{tpu_custom_call.1} parent=11 // pred_check_branch
          %183 = sbr.rel (%p181) target = $region20
        $region19: #{tpu_custom_call.1} parent=11 // pred_region
          _
        $region20: #{tpu_custom_call.1} parent=11 // pred_fallthru
          _
        // Predicated region
        $region21: #{tpu_custom_call.1} parent=11 // pred_check
          %p184 = pneg %p107
        $region22: #{tpu_custom_call.1} parent=11 // pred_check_branch
          %186 = sbr.rel (%p184) target = $region24
        $region23: #{tpu_custom_call.1} parent=11 // pred_region
          %188 = vsyncadd [#allocation6], 0
          %s189 = sshll.u32 %s3, 4
          %s190 = int_to_ptr.hbm [resolvable:$true] %s189
          %s191 = sshll.u32 [#allocation7], 4
          %s192 = int_to_ptr.vmem [resolvable:$true] %s191
          %197 = dma.hbm_to_vmem [thread:$0]  %s190, 1024, %s192, [#allocation6], 64, 64, 4
        $region24: #{tpu_custom_call.1} parent=11 // pred_fallthru
          _
        // Predicated region
        $region25: #{tpu_custom_call.1} parent=11 // pred_check
          %p198 = pneg %p128
        $region26: #{tpu_custom_call.1} parent=11 // pred_check_branch
          %200 = sbr.rel (%p198) target = $region28
        $region27: #{tpu_custom_call.1} parent=11 // pred_region
          _
        $region28: #{tpu_custom_call.1} parent=11 // pred_fallthru
          _
      $region12: #{tpu_custom_call.1} parent=5 // pred_fallthru
        _
      %p201 = scmp.lt.s32.totalorder %s18, 8
      // Predicated region
      $region29: #{tpu_custom_call.1} parent=5 // pred_check
        %p202 = pneg %p201
      $region30: #{tpu_custom_call.1} parent=5 // pred_check_branch
        %204 = sbr.rel (%p202) target = $region32
      $region31: #{tpu_custom_call.1} parent=5 // pred_region
        // Predicated region
        $region33: #{tpu_custom_call.1} parent=31 // pred_check
          %p205 = pneg %p38
        $region34: #{tpu_custom_call.1} parent=31 // pred_check_branch
          %207 = sbr.rel (%p205) target = $region36
        $region35: #{tpu_custom_call.1} parent=31 // pred_region
          %s208 = sand.u32 %s28, 1
          %s209 = scalar_lea.sflag [#allocation3], %s208
          %s210 = sand.u32 %s28, 1
          %s211 = smul.addr %s210, 128
          %s212 = scalar_lea.vmem [#allocation2], %s211
          %s213 = smul.u32 16, %s18
          %215 = vsyncadd %s209, 0
          %s216 = smul.addr %s213, 8
          %s217 = scalar_lea.hbm %s0, %s216
          %s218 = sshll.u32 %s217, 4
          %s219 = int_to_ptr.hbm [resolvable:$true] %s218
          %s220 = sshll.u32 %s212, 4
          %s221 = int_to_ptr.vmem [resolvable:$true] %s220
          %226 = dma.hbm_to_vmem [thread:$0]  %s219, 2048, %s221, %s209, 128, 128, 8
        $region36: #{tpu_custom_call.1} parent=31 // pred_fallthru
          _
      $region32: #{tpu_custom_call.1} parent=5 // pred_fallthru
        _
      %p227 = scmp.le.s32.totalorder 1, %s18
      %p228 = scmp.lt.s32.totalorder %s18, 9
      %p229 = pnand %p227, %p228
      %p230 = pneg %p229
      // Predicated region
      $region37: #{tpu_custom_call.1} parent=5 // pred_check
        _
      $region38: #{tpu_custom_call.1} parent=5 // pred_check_branch
        %232 = sbr.rel (%p229) target = $region40
      $region39: #{tpu_custom_call.1} parent=5 // pred_region
        %s233 = ssub.s32 %s18, 1
        %s234 = sand.u32 %s31, 1
        %s235 = scalar_lea.sflag [#allocation3], %s234
        %s236 = sand.u32 %s31, 1
        %s237 = smul.addr %s236, 128
        %s238 = scalar_lea.vmem [#allocation2], %s237
        // Predicated region
        $region41: #{tpu_custom_call.1} parent=39 // pred_check
          %p239 = pneg %p44
        $region42: #{tpu_custom_call.1} parent=39 // pred_check_branch
          %241 = sbr.rel (%p239) target = $region44
        $region43: #{tpu_custom_call.1} parent=39 // pred_region
          %243 = dma.done %s235, 2048
        $region44: #{tpu_custom_call.1} parent=39 // pred_fallthru
          _
        // Predicated region
        $region45: #{tpu_custom_call.1} parent=39 // pred_check
          %p244 = pneg %p65
        $region46: #{tpu_custom_call.1} parent=39 // pred_check_branch
          %246 = sbr.rel (%p244) target = $region48
        $region47: #{tpu_custom_call.1} parent=39 // pred_region
          %248 = dma.done [#allocation6], 16
        $region48: #{tpu_custom_call.1} parent=39 // pred_fallthru
          _
        // Predicated region
        $region49: #{tpu_custom_call.1} parent=39 // pred_check
          %p249 = pneg %p107
        $region50: #{tpu_custom_call.1} parent=39 // pred_check_branch
          %251 = sbr.rel (%p249) target = $region52
        $region51: #{tpu_custom_call.1} parent=39 // pred_region
          %253 = dma.done [#allocation6], 1024
        $region52: #{tpu_custom_call.1} parent=39 // pred_fallthru
          _
        %s254 = sand.u32 %s31, 1
        %s255 = scalar_lea.sflag [#allocation3], %s254
        %s256 = sand.u32 %s31, 1
        %s257 = smul.addr %s256, 128
        %s258 = scalar_lea.vmem [#allocation2], %s257
        %p259 = pneg %p44
        %p260 = pneg %p41
        %p261 = pneg %p65
        %p262 = pneg %p62
        %p263 = pneg %p86
        %p264 = pneg %p83
        %p265 = pneg %p107
        %p266 = pneg %p104
        %p267 = pneg %p128
        %p268 = pneg %p125
        %p269 = pneg %p154
        %p270 = pneg %p151
        %s271 = sand.u32 %s141, 1
        %s272 = scalar_lea.sflag [#allocation4], %s271
        %s273 = sand.u32 %s141, 1
        %s274 = smul.addr %s273, 128
        %s275 = scalar_lea.vmem [#allocation8], %s274
        %s276 = smul.u32 16, %s23
        %s277 = smul.u32 16, %s23
        %v278 = vld [vmem:[%s238] sm:$0xff]
        %v279 = vld [vmem:[%s238 + $0x8] sm:$0xff]
        %v280 = vld [vmem:[%s238 + $0x10] sm:$0xff]
        %v281 = vld [vmem:[%s238 + $0x18] sm:$0xff]
        %v282 = vld [vmem:[%s238 + $0x20] sm:$0xff]
        %v283 = vld [vmem:[%s238 + $0x28] sm:$0xff]
        %v284 = vld [vmem:[%s238 + $0x30] sm:$0xff]
        %v285 = vld [vmem:[%s238 + $0x38] sm:$0xff]
        %v286 = vld [vmem:[%s238 + $0x40] sm:$0xff]
        %v287 = vld [vmem:[%s238 + $0x48] sm:$0xff]
        %v288 = vld [vmem:[%s238 + $0x50] sm:$0xff]
        %v289 = vld [vmem:[%s238 + $0x58] sm:$0xff]
        %v290 = vld [vmem:[%s238 + $0x60] sm:$0xff]
        %v291 = vld [vmem:[%s238 + $0x68] sm:$0xff]
        %v292 = vld [vmem:[%s238 + $0x70] sm:$0xff]
        %v293 = vld [vmem:[%s238 + $0x78] sm:$0xff]
        %294 = vadd.xlane.f32.xlu0 %v278
        %v295 = vpop.xlane.xlu0 %294
        %296 = vadd.xlane.f32.xlu0 %v279
        %v297 = vpop.xlane.xlu0 %296
        %298 = vadd.xlane.f32.xlu0 %v280
        %v299 = vpop.xlane.xlu0 %298
        %300 = vadd.xlane.f32.xlu0 %v281
        %v301 = vpop.xlane.xlu0 %300
        %302 = vadd.xlane.f32.xlu0 %v282
        %v303 = vpop.xlane.xlu0 %302
        %304 = vadd.xlane.f32.xlu0 %v283
        %v305 = vpop.xlane.xlu0 %304
        %306 = vadd.xlane.f32.xlu0 %v284
        %v307 = vpop.xlane.xlu0 %306
        %308 = vadd.xlane.f32.xlu0 %v285
        %v309 = vpop.xlane.xlu0 %308
        %310 = vadd.xlane.f32.xlu0 %v286
        %v311 = vpop.xlane.xlu0 %310
        %312 = vadd.xlane.f32.xlu0 %v287
        %v313 = vpop.xlane.xlu0 %312
        %314 = vadd.xlane.f32.xlu0 %v288
        %v315 = vpop.xlane.xlu0 %314
        %316 = vadd.xlane.f32.xlu0 %v289
        %v317 = vpop.xlane.xlu0 %316
        %318 = vadd.xlane.f32.xlu0 %v290
        %v319 = vpop.xlane.xlu0 %318
        %320 = vadd.xlane.f32.xlu0 %v291
        %v321 = vpop.xlane.xlu0 %320
        %322 = vadd.xlane.f32.xlu0 %v292
        %v323 = vpop.xlane.xlu0 %322
        %324 = vadd.xlane.f32.xlu0 %v293
        %v325 = vpop.xlane.xlu0 %324
        %v326 = vrcp.pop 128.0
        %v327 = vmul.f32 128.0, %v326
        %v328 = vsub.f32 1.0, %v327
        %v329 = vmul.f32 %v326, %v328
        %v330 = vadd.f32 %v326, %v329
        %vm331 = vweird.f32 %v326
        %v332 = vsel %vm331, %v326, %v330
        %v333 = vmul.f32 %v295, %v332
        %v334 = vmul.f32 %v297, %v332
        %v335 = vmul.f32 %v299, %v332
        %v336 = vmul.f32 %v301, %v332
        %v337 = vmul.f32 %v303, %v332
        %v338 = vmul.f32 %v305, %v332
        %v339 = vmul.f32 %v307, %v332
        %v340 = vmul.f32 %v309, %v332
        %v341 = vmul.f32 %v311, %v332
        %v342 = vmul.f32 %v313, %v332
        %v343 = vmul.f32 %v315, %v332
        %v344 = vmul.f32 %v317, %v332
        %v345 = vmul.f32 %v319, %v332
        %v346 = vmul.f32 %v321, %v332
        %v347 = vmul.f32 %v323, %v332
        %v348 = vmul.f32 %v325, %v332
        %v349 = vsub.f32 %v278, %v333
        %v350 = vsub.f32 %v279, %v334
        %v351 = vsub.f32 %v280, %v335
        %v352 = vsub.f32 %v281, %v336
        %v353 = vsub.f32 %v282, %v337
        %v354 = vsub.f32 %v283, %v338
        %v355 = vsub.f32 %v284, %v339
        %v356 = vsub.f32 %v285, %v340
        %v357 = vsub.f32 %v286, %v341
        %v358 = vsub.f32 %v287, %v342
        %v359 = vsub.f32 %v288, %v343
        %v360 = vsub.f32 %v289, %v344
        %v361 = vsub.f32 %v290, %v345
        %v362 = vsub.f32 %v291, %v346
        %v363 = vsub.f32 %v292, %v347
        %v364 = vsub.f32 %v293, %v348
        %v365 = vmul.f32 %v349, %v349
        %v366 = vmul.f32 %v350, %v350
        %v367 = vmul.f32 %v351, %v351
        %v368 = vmul.f32 %v352, %v352
        %v369 = vmul.f32 %v353, %v353
        %v370 = vmul.f32 %v354, %v354
        %v371 = vmul.f32 %v355, %v355
        %v372 = vmul.f32 %v356, %v356
        %v373 = vmul.f32 %v357, %v357
        %v374 = vmul.f32 %v358, %v358
        %v375 = vmul.f32 %v359, %v359
        %v376 = vmul.f32 %v360, %v360
        %v377 = vmul.f32 %v361, %v361
        %v378 = vmul.f32 %v362, %v362
        %v379 = vmul.f32 %v363, %v363
        %v380 = vmul.f32 %v364, %v364
        %381 = vadd.xlane.f32.xlu0 %v365
        %v382 = vpop.xlane.xlu0 %381
        %383 = vadd.xlane.f32.xlu0 %v366
        %v384 = vpop.xlane.xlu0 %383
        %385 = vadd.xlane.f32.xlu0 %v367
        %v386 = vpop.xlane.xlu0 %385
        %387 = vadd.xlane.f32.xlu0 %v368
        %v388 = vpop.xlane.xlu0 %387
        %389 = vadd.xlane.f32.xlu0 %v369
        %v390 = vpop.xlane.xlu0 %389
        %391 = vadd.xlane.f32.xlu0 %v370
        %v392 = vpop.xlane.xlu0 %391
        %393 = vadd.xlane.f32.xlu0 %v371
        %v394 = vpop.xlane.xlu0 %393
        %395 = vadd.xlane.f32.xlu0 %v372
        %v396 = vpop.xlane.xlu0 %395
        %397 = vadd.xlane.f32.xlu0 %v373
        %v398 = vpop.xlane.xlu0 %397
        %399 = vadd.xlane.f32.xlu0 %v374
        %v400 = vpop.xlane.xlu0 %399
        %401 = vadd.xlane.f32.xlu0 %v375
        %v402 = vpop.xlane.xlu0 %401
        %403 = vadd.xlane.f32.xlu0 %v376
        %v404 = vpop.xlane.xlu0 %403
        %405 = vadd.xlane.f32.xlu0 %v377
        %v406 = vpop.xlane.xlu0 %405
        %407 = vadd.xlane.f32.xlu0 %v378
        %v408 = vpop.xlane.xlu0 %407
        %409 = vadd.xlane.f32.xlu0 %v379
        %v410 = vpop.xlane.xlu0 %409
        %411 = vadd.xlane.f32.xlu0 %v380
        %v412 = vpop.xlane.xlu0 %411
        %v413 = vrcp.pop 127.0
        %v414 = vmul.f32 127.0, %v413
        %v415 = vsub.f32 1.0, %v414
        %v416 = vmul.f32 %v413, %v415
        %v417 = vadd.f32 %v413, %v416
        %vm418 = vweird.f32 %v413
        %v419 = vsel %vm418, %v413, %v417
        %v420 = vmul.f32 %v382, %v419
        %v421 = vmul.f32 %v384, %v419
        %v422 = vmul.f32 %v386, %v419
        %v423 = vmul.f32 %v388, %v419
        %v424 = vmul.f32 %v390, %v419
        %v425 = vmul.f32 %v392, %v419
        %v426 = vmul.f32 %v394, %v419
        %v427 = vmul.f32 %v396, %v419
        %v428 = vmul.f32 %v398, %v419
        %v429 = vmul.f32 %v400, %v419
        %v430 = vmul.f32 %v402, %v419
        %v431 = vmul.f32 %v404, %v419
        %v432 = vmul.f32 %v406, %v419
        %v433 = vmul.f32 %v408, %v419
        %v434 = vmul.f32 %v410, %v419
        %v435 = vmul.f32 %v412, %v419
        %v436 = vrsqrt.pop %v420
        %v437 = vmul.f32 %v436, %v420
        %v438 = vmul.f32 %v437, %v436
        %v439 = vmul.f32 0.5, %v438
        %v440 = vsub.f32 1.5, %v439
        %v441 = vmul.f32 %v436, %v440
        %v442 = vmul.f32 %v420, %v441
        %vm443 = vcmp.eq.f32.partialorder %v420, inf
        %v444 = vsel %vm443, %v420, %v442
        %vm445 = vcmp.eq.f32.partialorder %v420, 0.0
        %v446 = vand.u32 %v420, 2147483648
        %v447 = vsel %vm445, %v446, %v444
        %v448 = vrsqrt.pop %v421
        %v449 = vmul.f32 %v448, %v421
        %v450 = vmul.f32 %v449, %v448
        %v451 = vmul.f32 0.5, %v450
        %v452 = vsub.f32 1.5, %v451
        %v453 = vmul.f32 %v448, %v452
        %v454 = vmul.f32 %v421, %v453
        %vm455 = vcmp.eq.f32.partialorder %v421, inf
        %v456 = vsel %vm455, %v421, %v454
        %vm457 = vcmp.eq.f32.partialorder %v421, 0.0
        %v458 = vand.u32 %v421, 2147483648
        %v459 = vsel %vm457, %v458, %v456
        %v460 = vrsqrt.pop %v422
        %v461 = vmul.f32 %v460, %v422
        %v462 = vmul.f32 %v461, %v460
        %v463 = vmul.f32 0.5, %v462
        %v464 = vsub.f32 1.5, %v463
        %v465 = vmul.f32 %v460, %v464
        %v466 = vmul.f32 %v422, %v465
        %vm467 = vcmp.eq.f32.partialorder %v422, inf
        %v468 = vsel %vm467, %v422, %v466
        %vm469 = vcmp.eq.f32.partialorder %v422, 0.0
        %v470 = vand.u32 %v422, 2147483648
        %v471 = vsel %vm469, %v470, %v468
        %v472 = vrsqrt.pop %v423
        %v473 = vmul.f32 %v472, %v423
        %v474 = vmul.f32 %v473, %v472
        %v475 = vmul.f32 0.5, %v474
        %v476 = vsub.f32 1.5, %v475
        %v477 = vmul.f32 %v472, %v476
        %v478 = vmul.f32 %v423, %v477
        %vm479 = vcmp.eq.f32.partialorder %v423, inf
        %v480 = vsel %vm479, %v423, %v478
        %vm481 = vcmp.eq.f32.partialorder %v423, 0.0
        %v482 = vand.u32 %v423, 2147483648
        %v483 = vsel %vm481, %v482, %v480
        %v484 = vrsqrt.pop %v424
        %v485 = vmul.f32 %v484, %v424
        %v486 = vmul.f32 %v485, %v484
        %v487 = vmul.f32 0.5, %v486
        %v488 = vsub.f32 1.5, %v487
        %v489 = vmul.f32 %v484, %v488
        %v490 = vmul.f32 %v424, %v489
        %vm491 = vcmp.eq.f32.partialorder %v424, inf
        %v492 = vsel %vm491, %v424, %v490
        %vm493 = vcmp.eq.f32.partialorder %v424, 0.0
        %v494 = vand.u32 %v424, 2147483648
        %v495 = vsel %vm493, %v494, %v492
        %v496 = vrsqrt.pop %v425
        %v497 = vmul.f32 %v496, %v425
        %v498 = vmul.f32 %v497, %v496
        %v499 = vmul.f32 0.5, %v498
        %v500 = vsub.f32 1.5, %v499
        %v501 = vmul.f32 %v496, %v500
        %v502 = vmul.f32 %v425, %v501
        %vm503 = vcmp.eq.f32.partialorder %v425, inf
        %v504 = vsel %vm503, %v425, %v502
        %vm505 = vcmp.eq.f32.partialorder %v425, 0.0
        %v506 = vand.u32 %v425, 2147483648
        %v507 = vsel %vm505, %v506, %v504
        %v508 = vrsqrt.pop %v426
        %v509 = vmul.f32 %v508, %v426
        %v510 = vmul.f32 %v509, %v508
        %v511 = vmul.f32 0.5, %v510
        %v512 = vsub.f32 1.5, %v511
        %v513 = vmul.f32 %v508, %v512
        %v514 = vmul.f32 %v426, %v513
        %vm515 = vcmp.eq.f32.partialorder %v426, inf
        %v516 = vsel %vm515, %v426, %v514
        %vm517 = vcmp.eq.f32.partialorder %v426, 0.0
        %v518 = vand.u32 %v426, 2147483648
        %v519 = vsel %vm517, %v518, %v516
        %v520 = vrsqrt.pop %v427
        %v521 = vmul.f32 %v520, %v427
        %v522 = vmul.f32 %v521, %v520
        %v523 = vmul.f32 0.5, %v522
        %v524 = vsub.f32 1.5, %v523
        %v525 = vmul.f32 %v520, %v524
        %v526 = vmul.f32 %v427, %v525
        %vm527 = vcmp.eq.f32.partialorder %v427, inf
        %v528 = vsel %vm527, %v427, %v526
        %vm529 = vcmp.eq.f32.partialorder %v427, 0.0
        %v530 = vand.u32 %v427, 2147483648
        %v531 = vsel %vm529, %v530, %v528
        %v532 = vrsqrt.pop %v428
        %v533 = vmul.f32 %v532, %v428
        %v534 = vmul.f32 %v533, %v532
        %v535 = vmul.f32 0.5, %v534
        %v536 = vsub.f32 1.5, %v535
        %v537 = vmul.f32 %v532, %v536
        %v538 = vmul.f32 %v428, %v537
        %vm539 = vcmp.eq.f32.partialorder %v428, inf
        %v540 = vsel %vm539, %v428, %v538
        %vm541 = vcmp.eq.f32.partialorder %v428, 0.0
        %v542 = vand.u32 %v428, 2147483648
        %v543 = vsel %vm541, %v542, %v540
        %v544 = vrsqrt.pop %v429
        %v545 = vmul.f32 %v544, %v429
        %v546 = vmul.f32 %v545, %v544
        %v547 = vmul.f32 0.5, %v546
        %v548 = vsub.f32 1.5, %v547
        %v549 = vmul.f32 %v544, %v548
        %v550 = vmul.f32 %v429, %v549
        %vm551 = vcmp.eq.f32.partialorder %v429, inf
        %v552 = vsel %vm551, %v429, %v550
        %vm553 = vcmp.eq.f32.partialorder %v429, 0.0
        %v554 = vand.u32 %v429, 2147483648
        %v555 = vsel %vm553, %v554, %v552
        %v556 = vrsqrt.pop %v430
        %v557 = vmul.f32 %v556, %v430
        %v558 = vmul.f32 %v557, %v556
        %v559 = vmul.f32 0.5, %v558
        %v560 = vsub.f32 1.5, %v559
        %v561 = vmul.f32 %v556, %v560
        %v562 = vmul.f32 %v430, %v561
        %vm563 = vcmp.eq.f32.partialorder %v430, inf
        %v564 = vsel %vm563, %v430, %v562
        %vm565 = vcmp.eq.f32.partialorder %v430, 0.0
        %v566 = vand.u32 %v430, 2147483648
        %v567 = vsel %vm565, %v566, %v564
        %v568 = vrsqrt.pop %v431
        %v569 = vmul.f32 %v568, %v431
        %v570 = vmul.f32 %v569, %v568
        %v571 = vmul.f32 0.5, %v570
        %v572 = vsub.f32 1.5, %v571
        %v573 = vmul.f32 %v568, %v572
        %v574 = vmul.f32 %v431, %v573
        %vm575 = vcmp.eq.f32.partialorder %v431, inf
        %v576 = vsel %vm575, %v431, %v574
        %vm577 = vcmp.eq.f32.partialorder %v431, 0.0
        %v578 = vand.u32 %v431, 2147483648
        %v579 = vsel %vm577, %v578, %v576
        %v580 = vrsqrt.pop %v432
        %v581 = vmul.f32 %v580, %v432
        %v582 = vmul.f32 %v581, %v580
        %v583 = vmul.f32 0.5, %v582
        %v584 = vsub.f32 1.5, %v583
        %v585 = vmul.f32 %v580, %v584
        %v586 = vmul.f32 %v432, %v585
        %vm587 = vcmp.eq.f32.partialorder %v432, inf
        %v588 = vsel %vm587, %v432, %v586
        %vm589 = vcmp.eq.f32.partialorder %v432, 0.0
        %v590 = vand.u32 %v432, 2147483648
        %v591 = vsel %vm589, %v590, %v588
        %v592 = vrsqrt.pop %v433
        %v593 = vmul.f32 %v592, %v433
        %v594 = vmul.f32 %v593, %v592
        %v595 = vmul.f32 0.5, %v594
        %v596 = vsub.f32 1.5, %v595
        %v597 = vmul.f32 %v592, %v596
        %v598 = vmul.f32 %v433, %v597
        %vm599 = vcmp.eq.f32.partialorder %v433, inf
        %v600 = vsel %vm599, %v433, %v598
        %vm601 = vcmp.eq.f32.partialorder %v433, 0.0
        %v602 = vand.u32 %v433, 2147483648
        %v603 = vsel %vm601, %v602, %v600
        %v604 = vrsqrt.pop %v434
        %v605 = vmul.f32 %v604, %v434
        %v606 = vmul.f32 %v605, %v604
        %v607 = vmul.f32 0.5, %v606
        %v608 = vsub.f32 1.5, %v607
        %v609 = vmul.f32 %v604, %v608
        %v610 = vmul.f32 %v434, %v609
        %vm611 = vcmp.eq.f32.partialorder %v434, inf
        %v612 = vsel %vm611, %v434, %v610
        %vm613 = vcmp.eq.f32.partialorder %v434, 0.0
        %v614 = vand.u32 %v434, 2147483648
        %v615 = vsel %vm613, %v614, %v612
        %v616 = vrsqrt.pop %v435
        %v617 = vmul.f32 %v616, %v435
        %v618 = vmul.f32 %v617, %v616
        %v619 = vmul.f32 0.5, %v618
        %v620 = vsub.f32 1.5, %v619
        %v621 = vmul.f32 %v616, %v620
        %v622 = vmul.f32 %v435, %v621
        %vm623 = vcmp.eq.f32.partialorder %v435, inf
        %v624 = vsel %vm623, %v435, %v622
        %vm625 = vcmp.eq.f32.partialorder %v435, 0.0
        %v626 = vand.u32 %v435, 2147483648
        %v627 = vsel %vm625, %v626, %v624
        %v628 = vadd.f32 %v447, 1e-06
        %v629 = vadd.f32 %v459, 1e-06
        %v630 = vadd.f32 %v471, 1e-06
        %v631 = vadd.f32 %v483, 1e-06
        %v632 = vadd.f32 %v495, 1e-06
        %v633 = vadd.f32 %v507, 1e-06
        %v634 = vadd.f32 %v519, 1e-06
        %v635 = vadd.f32 %v531, 1e-06
        %v636 = vadd.f32 %v543, 1e-06
        %v637 = vadd.f32 %v555, 1e-06
        %v638 = vadd.f32 %v567, 1e-06
        %v639 = vadd.f32 %v579, 1e-06
        %v640 = vadd.f32 %v591, 1e-06
        %v641 = vadd.f32 %v603, 1e-06
        %v642 = vadd.f32 %v615, 1e-06
        %v643 = vadd.f32 %v627, 1e-06
        %v644 = vrcp.pop %v628
        %v645 = vrcp.pop %v629
        %v646 = vrcp.pop %v630
        %v647 = vrcp.pop %v631
        %v648 = vrcp.pop %v632
        %v649 = vrcp.pop %v633
        %v650 = vrcp.pop %v634
        %v651 = vrcp.pop %v635
        %v652 = vrcp.pop %v636
        %v653 = vrcp.pop %v637
        %v654 = vrcp.pop %v638
        %v655 = vrcp.pop %v639
        %v656 = vrcp.pop %v640
        %v657 = vrcp.pop %v641
        %v658 = vrcp.pop %v642
        %v659 = vrcp.pop %v643
        %v660 = vld [vmem:[#allocation5] sm:$0x1]
        %v661 = vmul.f32 %v349, %v644
        %v662 = vmul.f32 %v350, %v645
        %v663 = vmul.f32 %v351, %v646
        %v664 = vmul.f32 %v352, %v647
        %v665 = vmul.f32 %v353, %v648
        %v666 = vmul.f32 %v354, %v649
        %v667 = vmul.f32 %v355, %v650
        %v668 = vmul.f32 %v356, %v651
        %v669 = vmul.f32 %v357, %v652
        %v670 = vmul.f32 %v358, %v653
        %v671 = vmul.f32 %v359, %v654
        %v672 = vmul.f32 %v360, %v655
        %v673 = vmul.f32 %v361, %v656
        %v674 = vmul.f32 %v362, %v657
        %v675 = vmul.f32 %v363, %v658
        %v676 = vmul.f32 %v364, %v659
        %v678 = vperm.slane %v660, 0
        %v680 = vmul.f32 %v678, %v661
        %v681 = vmul.f32 %v678, %v662
        %v682 = vmul.f32 %v678, %v663
        %v683 = vmul.f32 %v678, %v664
        %v684 = vmul.f32 %v678, %v665
        %v685 = vmul.f32 %v678, %v666
        %v686 = vmul.f32 %v678, %v667
        %v687 = vmul.f32 %v678, %v668
        %v688 = vmul.f32 %v678, %v669
        %v689 = vmul.f32 %v678, %v670
        %v690 = vmul.f32 %v678, %v671
        %v691 = vmul.f32 %v678, %v672
        %v692 = vmul.f32 %v678, %v673
        %v693 = vmul.f32 %v678, %v674
        %v694 = vmul.f32 %v678, %v675
        %v695 = vmul.f32 %v678, %v676
        %v696 = vld [vmem:[%s2] sm:$0x1]
        %v698 = vperm.slane %v696, 0
        %v700 = vadd.f32 %v680, %v698
        %v701 = vadd.f32 %v681, %v698
        %v702 = vadd.f32 %v682, %v698
        %v703 = vadd.f32 %v683, %v698
        %v704 = vadd.f32 %v684, %v698
        %v705 = vadd.f32 %v685, %v698
        %v706 = vadd.f32 %v686, %v698
        %v707 = vadd.f32 %v687, %v698
        %v708 = vadd.f32 %v688, %v698
        %v709 = vadd.f32 %v689, %v698
        %v710 = vadd.f32 %v690, %v698
        %v711 = vadd.f32 %v691, %v698
        %v712 = vadd.f32 %v692, %v698
        %v713 = vadd.f32 %v693, %v698
        %v714 = vadd.f32 %v694, %v698
        %v715 = vadd.f32 %v695, %v698
        %v716 = vpack.c.bf16 %v701, %v700
        %v717 = vpack.c.bf16 %v703, %v702
        %v718 = vpack.c.bf16 %v705, %v704
        %v719 = vpack.c.bf16 %v707, %v706
        %v720 = vpack.c.bf16 %v709, %v708
        %v721 = vpack.c.bf16 %v711, %v710
        %v722 = vpack.c.bf16 %v713, %v712
        %v723 = vpack.c.bf16 %v715, %v714
        %v724 = vld [vmem:[#allocation7] sm:$0xf]
        %v725 = vld [vmem:[#allocation7 + $0x4] sm:$0xf]
        %v726 = vld [vmem:[#allocation7 + $0x8] sm:$0xf]
        %v727 = vld [vmem:[#allocation7 + $0xc] sm:$0xf]
        %v728 = vld [vmem:[#allocation7 + $0x10] sm:$0xf]
        %v729 = vld [vmem:[#allocation7 + $0x14] sm:$0xf]
        %v730 = vld [vmem:[#allocation7 + $0x18] sm:$0xf]
        %v731 = vld [vmem:[#allocation7 + $0x1c] sm:$0xf]
        %v732 = vld [vmem:[#allocation7 + $0x20] sm:$0xf]
        %v733 = vld [vmem:[#allocation7 + $0x24] sm:$0xf]
        %v734 = vld [vmem:[#allocation7 + $0x28] sm:$0xf]
        %v735 = vld [vmem:[#allocation7 + $0x2c] sm:$0xf]
        %v736 = vld [vmem:[#allocation7 + $0x30] sm:$0xf]
        %v737 = vld [vmem:[#allocation7 + $0x34] sm:$0xf]
        %v738 = vld [vmem:[#allocation7 + $0x38] sm:$0xf]
        %v739 = vld [vmem:[#allocation7 + $0x3c] sm:$0xf]
        %v740 = vld [vmem:[%s4] sm:$0x1]
        %v742 = vperm.slane %v740, 0
        %v760 = vunpack.c.l.b16 %v724
        %v761 = vunpack.c.l.b16 %v725
        %v762 = vunpack.c.l.b16 %v726
        %v763 = vunpack.c.l.b16 %v727
        %v764 = vunpack.c.l.b16 %v728
        %v765 = vunpack.c.l.b16 %v729
        %v766 = vunpack.c.l.b16 %v730
        %v767 = vunpack.c.l.b16 %v731
        %v768 = vunpack.c.l.b16 %v732
        %v769 = vunpack.c.l.b16 %v733
        %v770 = vunpack.c.l.b16 %v734
        %v771 = vunpack.c.l.b16 %v735
        %v772 = vunpack.c.l.b16 %v736
        %v773 = vunpack.c.l.b16 %v737
        %v774 = vunpack.c.l.b16 %v738
        %v775 = vunpack.c.l.b16 %v739
        %v776 = vpack.c.b16 %v761, %v760
        %v777 = vpack.c.b16 %v763, %v762
        %v778 = vpack.c.b16 %v765, %v764
        %v779 = vpack.c.b16 %v767, %v766
        %v780 = vpack.c.b16 %v769, %v768
        %v781 = vpack.c.b16 %v771, %v770
        %v782 = vpack.c.b16 %v773, %v772
        %v783 = vpack.c.b16 %v775, %v774
        %792 = vmatpush.bf16.msra.mxu0 %v783
        %793 = vmatpush.bf16.msra.mxu0 %v782
        %794 = vmatpush.bf16.msra.mxu0 %v781
        %795 = vmatpush.bf16.msra.mxu0 %v780
        %796 = vmatpush.bf16.msra.mxu0 %v779
        %797 = vmatpush.bf16.msra.mxu0 %v778
        %798 = vmatpush.bf16.msra.mxu0 %v777
        %799 = vmatpush.bf16.msra.mxu0 %v776
        %800 = vmatmul.bf16.gmra.mxu0 %v716
        %v801 = vpop.f32.mrf.mxu0
        %v802 = vadd.f32 %v742, %v801
        %v803 = vpop.f32.mrf.mxu0
        %v804 = vadd.f32 %v742, %v803
        %805 = vmatmul.bf16.gmra.mxu0 %v717
        %v806 = vpop.f32.mrf.mxu0
        %v807 = vadd.f32 %v742, %v806
        %v808 = vpop.f32.mrf.mxu0
        %v809 = vadd.f32 %v742, %v808
        %810 = vmatmul.bf16.gmra.mxu0 %v718
        %v811 = vpop.f32.mrf.mxu0
        %v812 = vadd.f32 %v742, %v811
        %v813 = vpop.f32.mrf.mxu0
        %v814 = vadd.f32 %v742, %v813
        %815 = vmatmul.bf16.gmra.mxu0 %v719
        %v816 = vpop.f32.mrf.mxu0
        %v817 = vadd.f32 %v742, %v816
        %v818 = vpop.f32.mrf.mxu0
        %v819 = vadd.f32 %v742, %v818
        %820 = vmatmul.bf16.gmra.mxu0 %v720
        %v821 = vpop.f32.mrf.mxu0
        %v822 = vadd.f32 %v742, %v821
        %v823 = vpop.f32.mrf.mxu0
        %v824 = vadd.f32 %v742, %v823
        %825 = vmatmul.bf16.gmra.mxu0 %v721
        %v826 = vpop.f32.mrf.mxu0
        %v827 = vadd.f32 %v742, %v826
        %v828 = vpop.f32.mrf.mxu0
        %v829 = vadd.f32 %v742, %v828
        %830 = vmatmul.bf16.gmra.mxu0 %v722
        %v831 = vpop.f32.mrf.mxu0
        %v832 = vadd.f32 %v742, %v831
        %v833 = vpop.f32.mrf.mxu0
        %v834 = vadd.f32 %v742, %v833
        %835 = vmatmul.bf16.gmra.mxu0 %v723
        %v836 = vpop.f32.mrf.mxu0
        %v837 = vadd.f32 %v742, %v836
        %v838 = vpop.f32.mrf.mxu0
        %v839 = vadd.f32 %v742, %v838
        %840 = vdwg.mxu0
        %v841 = vadd.f32 %v278, %v802
        %v842 = vadd.f32 %v279, %v804
        %v843 = vadd.f32 %v280, %v807
        %v844 = vadd.f32 %v281, %v809
        %v845 = vadd.f32 %v282, %v812
        %v846 = vadd.f32 %v283, %v814
        %v847 = vadd.f32 %v284, %v817
        %v848 = vadd.f32 %v285, %v819
        %v849 = vadd.f32 %v286, %v822
        %v850 = vadd.f32 %v287, %v824
        %v851 = vadd.f32 %v288, %v827
        %v852 = vadd.f32 %v289, %v829
        %v853 = vadd.f32 %v290, %v832
        %v854 = vadd.f32 %v291, %v834
        %v855 = vadd.f32 %v292, %v837
        %v856 = vadd.f32 %v293, %v839
        %857 = vst [vmem:[%s275] sm:$0xff] %v841
        %858 = vst [vmem:[%s275 + $0x8] sm:$0xff] %v842
        %859 = vst [vmem:[%s275 + $0x10] sm:$0xff] %v843
        %860 = vst [vmem:[%s275 + $0x18] sm:$0xff] %v844
        %861 = vst [vmem:[%s275 + $0x20] sm:$0xff] %v845
        %862 = vst [vmem:[%s275 + $0x28] sm:$0xff] %v846
        %863 = vst [vmem:[%s275 + $0x30] sm:$0xff] %v847
        %864 = vst [vmem:[%s275 + $0x38] sm:$0xff] %v848
        %865 = vst [vmem:[%s275 + $0x40] sm:$0xff] %v849
        %866 = vst [vmem:[%s275 + $0x48] sm:$0xff] %v850
        %867 = vst [vmem:[%s275 + $0x50] sm:$0xff] %v851
        %868 = vst [vmem:[%s275 + $0x58] sm:$0xff] %v852
        %869 = vst [vmem:[%s275 + $0x60] sm:$0xff] %v853
        %870 = vst [vmem:[%s275 + $0x68] sm:$0xff] %v854
        %871 = vst [vmem:[%s275 + $0x70] sm:$0xff] %v855
        %872 = vst [vmem:[%s275 + $0x78] sm:$0xff] %v856
        %s873 = sand.u32 %s141, 1
        %s874 = scalar_lea.sflag [#allocation4], %s873
        %s875 = sand.u32 %s141, 1
        %s876 = smul.addr %s875, 128
        %s877 = scalar_lea.vmem [#allocation8], %s876
        // Predicated region
        $region53: #{tpu_custom_call.1} parent=39 // pred_check
          %p878 = pneg %p151
        $region54: #{tpu_custom_call.1} parent=39 // pred_check_branch
          %880 = sbr.rel (%p878) target = $region56
        $region55: #{tpu_custom_call.1} parent=39 // pred_region
          %s881 = smul.u32 16, %s23
          %883 = vsyncadd %s874, 0
          %s884 = smul.addr %s881, 8
          %s885 = scalar_lea.hbm %s5, %s884
          %s886 = sshll.u32 %s877, 4
          %s887 = int_to_ptr.vmem [resolvable:$true] %s886
          %s888 = sshll.u32 %s885, 4
          %s889 = int_to_ptr.hbm [resolvable:$true] %s888
          %894 = dma.vmem_to_hbm [thread:$0]  %s887, 2048, %s889, %s874, 128, 128, 8
        $region56: #{tpu_custom_call.1} parent=39 // pred_fallthru
          _
      $region40: #{tpu_custom_call.1} parent=5 // pred_fallthru
        _
      %p895 = scmp.le.s32.totalorder 2, %s18
      // Predicated region
      $region57: #{tpu_custom_call.1} parent=5 // pred_check
        %p896 = pneg %p895
      $region58: #{tpu_custom_call.1} parent=5 // pred_check_branch
        %898 = sbr.rel (%p896) target = $region60
      $region59: #{tpu_custom_call.1} parent=5 // pred_region
        %s899 = ssub.s32 %s18, 2
        // Predicated region
        $region61: #{tpu_custom_call.1} parent=59 // pred_check
          %p900 = pneg %p157
        $region62: #{tpu_custom_call.1} parent=59 // pred_check_branch
          %902 = sbr.rel (%p900) target = $region64
        $region63: #{tpu_custom_call.1} parent=59 // pred_region
          %s903 = sand.u32 %s142, 1
          %s904 = scalar_lea.sflag [#allocation4], %s903
          %s905 = sand.u32 %s142, 1
          %s906 = smul.addr %s905, 128
          %s907 = scalar_lea.vmem [#allocation8], %s906
          %909 = dma.done %s904, 2048
        $region64: #{tpu_custom_call.1} parent=59 // pred_fallthru
          _
      $region60: #{tpu_custom_call.1} parent=5 // pred_fallthru
        _
    $region6: #{tpu_custom_call.1} parent=1 // loop_footer
      %s22 = sadd.s32 1, %s18
    $region7: #{tpu_custom_call.1} parent=1 // loop_footer_branch
      %17 = sbr.rel target = $region3
    $region8: #{tpu_custom_call.1} parent=1 // loop_exit
      _
    %910 = vsyncpa [#allocation3], 1
    %s911 = scalar_lea.sflag [#allocation3], 1
    %912 = vsyncpa %s911, 1
    %913 = vsyncpa [#allocation6], 1
    %914 = vsyncpa [#allocation4], 1
    %s915 = scalar_lea.sflag [#allocation4], 1
    %916 = vsyncpa %s915, 1

</llo_original>
